<compile_context>
chip_gen: v6e
topology: v6e:2x2x1
jax: 0.10.0
libtpu: 0.0.40
codegen_flags: <defaults>
</compile_context>

<pallas_src>
import jax
import jax.numpy as jnp
from jax import lax
from jax.experimental import pallas as pl
from jax.experimental.pallas import tpu as pltpu


def _round_up(x, m):
    return ((x + m - 1) // m) * m


def _conv_gemm_kernel(w_ref, p_ref, b_ref, o_ref):
    # w_ref: (Cout, K) weights, p_ref: (K, tm) patch columns, b_ref: (Cout, 1).
    # M is the lane dimension of both the RHS and the output tile, so stores
    # are unmasked and the MXU N dimension is fully used.
    acc = jnp.dot(w_ref[...], p_ref[...], preferred_element_type=jnp.float32)
    o_ref[...] = (acc + b_ref[...]).astype(o_ref.dtype)


def conv2d_nchw(x, weight, bias, *, stride, padding, tm_max=1024):
    """Conv2d (PyTorch cross-correlation semantics), NCHW / OIHW, via Pallas.

    x:      (N, Cin, H, W) f32
    weight: (Cout, Cin, KH, KW) f32
    bias:   (Cout,) f32
    returns (N, Cout, Ho, Wo) f32
    """
    N, Cin, H, W = x.shape
    Cout, _, KH, KW = weight.shape
    Ho = (H + 2 * padding - KH) // stride + 1
    Wo = (W + 2 * padding - KW) // stride + 1

    xp = x if padding == 0 else jnp.pad(
        x, ((0, 0), (0, 0), (padding, padding), (padding, padding)))

    # im2col built directly in the transposed (K, M) layout so the kernel's
    # output is lane-dense along M (no extra transpose inside the kernel).
    # TODO(synk): at production sizes move this patch assembly into the kernel
    # (keep x in HBM with memory_space=pl.ANY, DMA the 3 input row-bands a tile
    # needs and build the 9 taps in VMEM) to cut HBM traffic ~9x; at these
    # shapes the wrapper im2col is negligible and XLA fuses the strided slices.
    cols = []
    for kh in range(KH):
        for kw in range(KW):
            cols.append(xp[:, :, kh:kh + stride * Ho:stride,
                               kw:kw + stride * Wo:stride])      # (N, Cin, Ho, Wo)
    pt = jnp.stack(cols, axis=0)               # (KH*KW, N, Cin, Ho, Wo)
    pt = pt.transpose(0, 2, 1, 3, 4)           # (KH*KW, Cin, N, Ho, Wo)
    K = KH * KW * Cin
    M = N * Ho * Wo
    pt = pt.reshape(K, M)

    # Weight flattened with K ordered (kh, kw, cin) to match the patches.
    w_mat = weight.transpose(0, 2, 3, 1).reshape(Cout, K)
    b_mat = bias.reshape(Cout, 1)

    # Large lane tiles: whole M (rounded to 128) when small, tm_max otherwise.
    # Per-step VMEM is ~K*tm*4 bytes of patches + tiny weight/bias/output tile,
    # far below the scoped VMEM limit on v5e/v6e/v7x even double-buffered.
    tm = min(tm_max, _round_up(M, 128))
    M_pad = _round_up(M, tm)
    if M_pad != M:
        pt = jnp.pad(pt, ((0, 0), (0, M_pad - M)))

    grid = (M_pad // tm,)
    cost = pl.CostEstimate(
        flops=2 * M_pad * K * Cout,
        transcendentals=0,
        bytes_accessed=4 * (Cout * K + K * M_pad + Cout + Cout * M_pad))

    out_mat = pl.pallas_call(
        _conv_gemm_kernel,
        out_shape=jax.ShapeDtypeStruct((Cout, M_pad), x.dtype),
        grid_spec=pltpu.PrefetchScalarGridSpec(
            num_scalar_prefetch=0,
            grid=grid,
            in_specs=[
                pl.BlockSpec((Cout, K), lambda i: (0, 0)),   # weights (resident)
                pl.BlockSpec((K, tm), lambda i: (0, i)),     # patch columns
                pl.BlockSpec((Cout, 1), lambda i: (0, 0)),   # bias (resident)
            ],
            out_specs=pl.BlockSpec((Cout, tm), lambda i: (0, i)),
        ),
        compiler_params=pltpu.CompilerParams(
            dimension_semantics=("parallel",)),
        cost_estimate=cost,
    )(w_mat, pt, b_mat)

    out_mat = out_mat[:, :M]                                   # drop lane padding
    return out_mat.reshape(Cout, N, Ho, Wo).transpose(1, 0, 2, 3)


def conv_transpose2d_nchw(x, weight, bias):
    """ConvTranspose2d(kernel_size=3, stride=2, padding=1), PyTorch semantics.

    x:      (N, Cin, H, W)
    weight: (Cin, Cout, 3, 3)  (PyTorch ConvTranspose2d layout)
    bias:   (Cout,)
    returns (N, Cout, 2H-1, 2W-1)
    """
    N, Cin, H, W = x.shape
    x_dil = jnp.zeros((N, Cin, 2 * H - 1, 2 * W - 1), x.dtype)
    x_dil = x_dil.at[:, :, ::2, ::2].set(x)
    # Equivalent stride-1 conv: flip spatial taps, swap in/out channel axes.
    w_eff = jnp.flip(weight, axis=(2, 3)).transpose(1, 0, 2, 3)   # (Cout, Cin, 3, 3)
    return conv2d_nchw(x_dil, w_eff, bias, stride=1, padding=1)


@jax.jit
def mgrl_block_forward(x, params):
    """MGRL_block.forward: 3x up-scale, 3x down-scale, (encoder), final 1x1 conv."""
    out_1 = conv_transpose2d_nchw(x, params["up1_w"], params["up1_b"])
    out_2 = conv_transpose2d_nchw(out_1, params["up2_w"], params["up2_b"])
    out_3 = conv_transpose2d_nchw(out_2, params["up3_w"], params["up3_b"])
    dec_out_3 = conv2d_nchw(out_3, params["down3_w"], params["down3_b"],
                            stride=2, padding=1)
    dec_out_2 = conv2d_nchw(dec_out_3, params["down2_w"], params["down2_b"],
                            stride=2, padding=1)
    dec_out_1 = conv2d_nchw(dec_out_2, params["down1_w"], params["down1_b"],
                            stride=2, padding=1)
    # TODO(synk): fine_encoder (Encoder/EncoderLayer/AttentionLayer/FullAttention)
    # definitions are not provided in the spec; treated as identity here.
    rep1 = dec_out_1
    # final_layer: 1x1 Conv2d + Dropout (Dropout is identity in eval mode).
    output = conv2d_nchw(rep1, params["final_w"], params["final_b"],
                         stride=1, padding=0)
    return output


if __name__ == "__main__":
    key = jax.random.PRNGKey(0)
    ks = jax.random.split(key, 8)

    # Small shapes consistent with the module: batch=2, d_model=4, 16x16 grid.
    B, d_model, H, W = 2, 4, 16, 16

    def conv_params(kk, cin, cout, ksize):            # Conv2d (OIHW)
        kw_, kb_ = jax.random.split(kk)
        bound = 1.0 / ((cin * ksize * ksize) ** 0.5)
        w = jax.random.uniform(kw_, (cout, cin, ksize, ksize), jnp.float32,
                               minval=-bound, maxval=bound)
        b = jax.random.uniform(kb_, (cout,), jnp.float32,
                               minval=-bound, maxval=bound)
        return w, b

    def convT_params(kk, cin, cout, ksize):           # ConvTranspose2d (IOHW)
        kw_, kb_ = jax.random.split(kk)
        bound = 1.0 / ((cout * ksize * ksize) ** 0.5)
        w = jax.random.uniform(kw_, (cin, cout, ksize, ksize), jnp.float32,
                               minval=-bound, maxval=bound)
        b = jax.random.uniform(kb_, (cout,), jnp.float32,
                               minval=-bound, maxval=bound)
        return w, b

    x = jax.random.normal(ks[0], (B, d_model, H, W), dtype=jnp.float32)

    params = {}
    params["up1_w"], params["up1_b"] = convT_params(ks[1], d_model, d_model, 3)
    params["up2_w"], params["up2_b"] = convT_params(ks[2], d_model, d_model, 3)
    params["up3_w"], params["up3_b"] = convT_params(ks[3], d_model, d_model, 3)
    params["down3_w"], params["down3_b"] = conv_params(ks[4], d_model, d_model, 3)
    params["down2_w"], params["down2_b"] = conv_params(ks[5], d_model, d_model, 3)
    params["down1_w"], params["down1_b"] = conv_params(ks[6], d_model, d_model, 3)
    params["final_w"], params["final_b"] = conv_params(ks[7], d_model, d_model, 1)

    out = mgrl_block_forward(x, params)
    out = jax.block_until_ready(out)
    assert out.shape == (B, d_model, H, W), out.shape

    # --- cross-check against XLA's native convolutions ----------------------
    dn = ("NCHW", "OIHW", "NCHW")
    hp = lax.Precision.HIGHEST

    def ref_down(v, w, b):
        return lax.conv_general_dilated(
            v, w, (2, 2), ((1, 1), (1, 1)), dimension_numbers=dn,
            precision=hp) + b.reshape(1, -1, 1, 1)

    def ref_up(v, wt, b):
        w_eff = jnp.flip(wt, axis=(2, 3)).transpose(1, 0, 2, 3)
        return lax.conv_general_dilated(
            v, w_eff, (1, 1), ((1, 1), (1, 1)), lhs_dilation=(2, 2),
            dimension_numbers=dn, precision=hp) + b.reshape(1, -1, 1, 1)

    def ref_1x1(v, w, b):
        return lax.conv_general_dilated(
            v, w, (1, 1), ((0, 0), (0, 0)), dimension_numbers=dn,
            precision=hp) + b.reshape(1, -1, 1, 1)

    r = ref_up(x, params["up1_w"], params["up1_b"])
    r = ref_up(r, params["up2_w"], params["up2_b"])
    r = ref_up(r, params["up3_w"], params["up3_b"])
    r = ref_down(r, params["down3_w"], params["down3_b"])
    r = ref_down(r, params["down2_w"], params["down2_b"])
    r = ref_down(r, params["down1_w"], params["down1_b"])
    r = ref_1x1(r, params["final_w"], params["final_b"])

    assert r.shape == out.shape, (r.shape, out.shape)
    # f32 everywhere; tolerance covers accumulation drift across the 7-conv chain.
    assert jnp.allclose(out, r, atol=5e-4, rtol=5e-4), \
        float(jnp.max(jnp.abs(out - r)))

    print("KERNEL_OK")
</pallas_src>

<mosaic_0001>
module attributes {stable_mosaic.version = 11 : i64} {
  func.func @_conv_gemm_kernel(%arg0: i32, %arg1: memref<4x36xf32, #tpu.memory_space<vmem>>, %arg2: memref<36x1024xf32, #tpu.memory_space<vmem>>, %arg3: memref<4x1xf32, #tpu.memory_space<vmem>>, %arg4: memref<4x1024xf32, #tpu.memory_space<vmem>>) attributes {dimension_semantics = [#tpu.dimension_semantics<parallel>], iteration_bounds = array<i64: 2>, scalar_prefetch = 0 : i64, scratch_operands = 0 : i64, tpu.core_type = #tpu.core_type<tc>, window_params = [{pipeline_mode = #tpu.pipeline_mode<synchronous>, transform_indices = @transform_0, window_bounds = array<i64: 4, 36>}, {transform_indices = @transform_1, window_bounds = array<i64: 36, 1024>}, {pipeline_mode = #tpu.pipeline_mode<synchronous>, transform_indices = @transform_2, window_bounds = array<i64: 4, 1>}, {transform_indices = @transform_3, window_bounds = array<i64: 4, 1024>}]} {
    %c0 = arith.constant 0 : index
    %c0_0 = arith.constant 0 : index
    %0 = vector.load %arg1[%c0, %c0_0] : memref<4x36xf32, #tpu.memory_space<vmem>>, vector<4x36xf32>
    %c0_1 = arith.constant 0 : index
    %c0_2 = arith.constant 0 : index
    %1 = vector.load %arg2[%c0_1, %c0_2] : memref<36x1024xf32, #tpu.memory_space<vmem>>, vector<36x1024xf32>
    %cst = arith.constant dense<0.000000e+00> : vector<4x1024xf32>
    %2 = tpu.matmul %0, %1, %cst {dimension_numbers = #tpu.dot_dimension_numbers<[1], [0], [0], [1], [0, 0, 1, 1], [], []>} : vector<4x36xf32>, vector<36x1024xf32>, vector<4x1024xf32> -> vector<4x1024xf32>
    %c0_3 = arith.constant 0 : index
    %c0_4 = arith.constant 0 : index
    %3 = vector.load %arg3[%c0_3, %c0_4] : memref<4x1xf32, #tpu.memory_space<vmem>>, vector<4x1xf32>
    %4 = vector.broadcast %3 : vector<4x1xf32> to vector<4x1024xf32>
    %5 = arith.addf %2, %4 : vector<4x1024xf32>
    %c0_5 = arith.constant 0 : index
    %c0_6 = arith.constant 0 : index
    %6 = vector.load %arg4[%c0_5, %c0_6] : memref<4x1024xf32, #tpu.memory_space<vmem>>, vector<4x1024xf32>
    tpu.vector_store %arg4[%c0_5, %c0_6], %5 {strides = array<i32>} : memref<4x1024xf32, #tpu.memory_space<vmem>>, vector<4x1024xf32>,
    return
  }
  func.func @transform_0(%arg0: i32) -> (i32, i32) {
    %c0_i32 = arith.constant 0 : i32
    %c0_i32_0 = arith.constant 0 : i32
    %c0_i32_1 = arith.constant 0 : i32
    return %c0_i32, %c0_i32_0 : i32, i32
  }
  func.func @transform_1(%arg0: i32) -> (i32, i32) {
    %c0_i32 = arith.constant 0 : i32
    %c0_i32_0 = arith.constant 0 : i32
    return %c0_i32, %arg0 : i32, i32
  }
  func.func @transform_2(%arg0: i32) -> (i32, i32) {
    %c0_i32 = arith.constant 0 : i32
    %c0_i32_0 = arith.constant 0 : i32
    %c0_i32_1 = arith.constant 0 : i32
    return %c0_i32, %c0_i32_0 : i32, i32
  }
  func.func @transform_3(%arg0: i32) -> (i32, i32) {
    %c0_i32 = arith.constant 0 : i32
    %c0_i32_0 = arith.constant 0 : i32
    return %c0_i32, %arg0 : i32, i32
  }
}

module attributes {stable_mosaic.version = 11 : i64} {
  func.func @_conv_gemm_kernel(%arg0: i32, %arg1: memref<4x36xf32, #tpu.memory_space<vmem>>, %arg2: memref<36x1024xf32, #tpu.memory_space<vmem>>, %arg3: memref<4x1xf32, #tpu.memory_space<vmem>>, %arg4: memref<4x1024xf32, #tpu.memory_space<vmem>>) attributes {dimension_semantics = [#tpu.dimension_semantics<parallel>], iteration_bounds = array<i64: 8>, scalar_prefetch = 0 : i64, scratch_operands = 0 : i64, tpu.core_type = #tpu.core_type<tc>, window_params = [{pipeline_mode = #tpu.pipeline_mode<synchronous>, transform_indices = @transform_0, window_bounds = array<i64: 4, 36>}, {transform_indices = @transform_1, window_bounds = array<i64: 36, 1024>}, {pipeline_mode = #tpu.pipeline_mode<synchronous>, transform_indices = @transform_2, window_bounds = array<i64: 4, 1>}, {transform_indices = @transform_3, window_bounds = array<i64: 4, 1024>}]} {
    %c0 = arith.constant 0 : index
    %c0_0 = arith.constant 0 : index
    %0 = vector.load %arg1[%c0, %c0_0] : memref<4x36xf32, #tpu.memory_space<vmem>>, vector<4x36xf32>
    %c0_1 = arith.constant 0 : index
    %c0_2 = arith.constant 0 : index
    %1 = vector.load %arg2[%c0_1, %c0_2] : memref<36x1024xf32, #tpu.memory_space<vmem>>, vector<36x1024xf32>
    %cst = arith.constant dense<0.000000e+00> : vector<4x1024xf32>
    %2 = tpu.matmul %0, %1, %cst {dimension_numbers = #tpu.dot_dimension_numbers<[1], [0], [0], [1], [0, 0, 1, 1], [], []>} : vector<4x36xf32>, vector<36x1024xf32>, vector<4x1024xf32> -> vector<4x1024xf32>
    %c0_3 = arith.constant 0 : index
    %c0_4 = arith.constant 0 : index
    %3 = vector.load %arg3[%c0_3, %c0_4] : memref<4x1xf32, #tpu.memory_space<vmem>>, vector<4x1xf32>
    %4 = vector.broadcast %3 : vector<4x1xf32> to vector<4x1024xf32>
    %5 = arith.addf %2, %4 : vector<4x1024xf32>
    %c0_5 = arith.constant 0 : index
    %c0_6 = arith.constant 0 : index
    %6 = vector.load %arg4[%c0_5, %c0_6] : memref<4x1024xf32, #tpu.memory_space<vmem>>, vector<4x1024xf32>
    tpu.vector_store %arg4[%c0_5, %c0_6], %5 {strides = array<i32>} : memref<4x1024xf32, #tpu.memory_space<vmem>>, vector<4x1024xf32>,
    return
  }
  func.func @transform_0(%arg0: i32) -> (i32, i32) {
    %c0_i32 = arith.constant 0 : i32
    %c0_i32_0 = arith.constant 0 : i32
    %c0_i32_1 = arith.constant 0 : i32
    return %c0_i32, %c0_i32_0 : i32, i32
  }
  func.func @transform_1(%arg0: i32) -> (i32, i32) {
    %c0_i32 = arith.constant 0 : i32
    %c0_i32_0 = arith.constant 0 : i32
    return %c0_i32, %arg0 : i32, i32
  }
  func.func @transform_2(%arg0: i32) -> (i32, i32) {
    %c0_i32 = arith.constant 0 : i32
    %c0_i32_0 = arith.constant 0 : i32
    %c0_i32_1 = arith.constant 0 : i32
    return %c0_i32, %c0_i32_0 : i32, i32
  }
  func.func @transform_3(%arg0: i32) -> (i32, i32) {
    %c0_i32 = arith.constant 0 : i32
    %c0_i32_0 = arith.constant 0 : i32
    return %c0_i32, %arg0 : i32, i32
  }
}

module attributes {stable_mosaic.version = 11 : i64} {
  func.func @_conv_gemm_kernel(%arg0: i32, %arg1: memref<4x36xf32, #tpu.memory_space<vmem>>, %arg2: memref<36x1024xf32, #tpu.memory_space<vmem>>, %arg3: memref<4x1xf32, #tpu.memory_space<vmem>>, %arg4: memref<4x1024xf32, #tpu.memory_space<vmem>>) attributes {dimension_semantics = [#tpu.dimension_semantics<parallel>], iteration_bounds = array<i64: 29>, scalar_prefetch = 0 : i64, scratch_operands = 0 : i64, tpu.core_type = #tpu.core_type<tc>, window_params = [{pipeline_mode = #tpu.pipeline_mode<synchronous>, transform_indices = @transform_0, window_bounds = array<i64: 4, 36>}, {transform_indices = @transform_1, window_bounds = array<i64: 36, 1024>}, {pipeline_mode = #tpu.pipeline_mode<synchronous>, transform_indices = @transform_2, window_bounds = array<i64: 4, 1>}, {transform_indices = @transform_3, window_bounds = array<i64: 4, 1024>}]} {
    %c0 = arith.constant 0 : index
    %c0_0 = arith.constant 0 : index
    %0 = vector.load %arg1[%c0, %c0_0] : memref<4x36xf32, #tpu.memory_space<vmem>>, vector<4x36xf32>
    %c0_1 = arith.constant 0 : index
    %c0_2 = arith.constant 0 : index
    %1 = vector.load %arg2[%c0_1, %c0_2] : memref<36x1024xf32, #tpu.memory_space<vmem>>, vector<36x1024xf32>
    %cst = arith.constant dense<0.000000e+00> : vector<4x1024xf32>
    %2 = tpu.matmul %0, %1, %cst {dimension_numbers = #tpu.dot_dimension_numbers<[1], [0], [0], [1], [0, 0, 1, 1], [], []>} : vector<4x36xf32>, vector<36x1024xf32>, vector<4x1024xf32> -> vector<4x1024xf32>
    %c0_3 = arith.constant 0 : index
    %c0_4 = arith.constant 0 : index
    %3 = vector.load %arg3[%c0_3, %c0_4] : memref<4x1xf32, #tpu.memory_space<vmem>>, vector<4x1xf32>
    %4 = vector.broadcast %3 : vector<4x1xf32> to vector<4x1024xf32>
    %5 = arith.addf %2, %4 : vector<4x1024xf32>
    %c0_5 = arith.constant 0 : index
    %c0_6 = arith.constant 0 : index
    %6 = vector.load %arg4[%c0_5, %c0_6] : memref<4x1024xf32, #tpu.memory_space<vmem>>, vector<4x1024xf32>
    tpu.vector_store %arg4[%c0_5, %c0_6], %5 {strides = array<i32>} : memref<4x1024xf32, #tpu.memory_space<vmem>>, vector<4x1024xf32>,
    return
  }
  func.func @transform_0(%arg0: i32) -> (i32, i32) {
    %c0_i32 = arith.constant 0 : i32
    %c0_i32_0 = arith.constant 0 : i32
    %c0_i32_1 = arith.constant 0 : i32
    return %c0_i32, %c0_i32_0 : i32, i32
  }
  func.func @transform_1(%arg0: i32) -> (i32, i32) {
    %c0_i32 = arith.constant 0 : i32
    %c0_i32_0 = arith.constant 0 : i32
    return %c0_i32, %arg0 : i32, i32
  }
  func.func @transform_2(%arg0: i32) -> (i32, i32) {
    %c0_i32 = arith.constant 0 : i32
    %c0_i32_0 = arith.constant 0 : i32
    %c0_i32_1 = arith.constant 0 : i32
    return %c0_i32, %c0_i32_0 : i32, i32
  }
  func.func @transform_3(%arg0: i32) -> (i32, i32) {
    %c0_i32 = arith.constant 0 : i32
    %c0_i32_0 = arith.constant 0 : i32
    return %c0_i32, %arg0 : i32, i32
  }
}

module attributes {stable_mosaic.version = 11 : i64} {
  func.func @_conv_gemm_kernel(%arg0: i32, %arg1: memref<4x36xf32, #tpu.memory_space<vmem>>, %arg2: memref<36x512xf32, #tpu.memory_space<vmem>>, %arg3: memref<4x1xf32, #tpu.memory_space<vmem>>, %arg4: memref<4x512xf32, #tpu.memory_space<vmem>>) attributes {dimension_semantics = [#tpu.dimension_semantics<parallel>], iteration_bounds = array<i64: 1>, scalar_prefetch = 0 : i64, scratch_operands = 0 : i64, tpu.core_type = #tpu.core_type<tc>, window_params = [{pipeline_mode = #tpu.pipeline_mode<synchronous>, transform_indices = @transform_0, window_bounds = array<i64: 4, 36>}, {transform_indices = @transform_1, window_bounds = array<i64: 36, 512>}, {pipeline_mode = #tpu.pipeline_mode<synchronous>, transform_indices = @transform_2, window_bounds = array<i64: 4, 1>}, {transform_indices = @transform_3, window_bounds = array<i64: 4, 512>}]} {
    %c0 = arith.constant 0 : index
    %c0_0 = arith.constant 0 : index
    %0 = vector.load %arg1[%c0, %c0_0] : memref<4x36xf32, #tpu.memory_space<vmem>>, vector<4x36xf32>
    %c0_1 = arith.constant 0 : index
    %c0_2 = arith.constant 0 : index
    %1 = vector.load %arg2[%c0_1, %c0_2] : memref<36x512xf32, #tpu.memory_space<vmem>>, vector<36x512xf32>
    %cst = arith.constant dense<0.000000e+00> : vector<4x512xf32>
    %2 = tpu.matmul %0, %1, %cst {dimension_numbers = #tpu.dot_dimension_numbers<[1], [0], [0], [1], [0, 0, 1, 1], [], []>} : vector<4x36xf32>, vector<36x512xf32>, vector<4x512xf32> -> vector<4x512xf32>
    %c0_3 = arith.constant 0 : index
    %c0_4 = arith.constant 0 : index
    %3 = vector.load %arg3[%c0_3, %c0_4] : memref<4x1xf32, #tpu.memory_space<vmem>>, vector<4x1xf32>
    %4 = vector.broadcast %3 : vector<4x1xf32> to vector<4x512xf32>
    %5 = arith.addf %2, %4 : vector<4x512xf32>
    %c0_5 = arith.constant 0 : index
    %c0_6 = arith.constant 0 : index
    %6 = vector.load %arg4[%c0_5, %c0_6] : memref<4x512xf32, #tpu.memory_space<vmem>>, vector<4x512xf32>
    tpu.vector_store %arg4[%c0_5, %c0_6], %5 {strides = array<i32>} : memref<4x512xf32, #tpu.memory_space<vmem>>, vector<4x512xf32>,
    return
  }
  func.func @transform_0(%arg0: i32) -> (i32, i32) {
    %c0_i32 = arith.constant 0 : i32
    %c0_i32_0 = arith.constant 0 : i32
    %c0_i32_1 = arith.constant 0 : i32
    return %c0_i32, %c0_i32_0 : i32, i32
  }
  func.func @transform_1(%arg0: i32) -> (i32, i32) {
    %c0_i32 = arith.constant 0 : i32
    %c0_i32_0 = arith.constant 0 : i32
    return %c0_i32, %arg0 : i32, i32
  }
  func.func @transform_2(%arg0: i32) -> (i32, i32) {
    %c0_i32 = arith.constant 0 : i32
    %c0_i32_0 = arith.constant 0 : i32
    %c0_i32_1 = arith.constant 0 : i32
    return %c0_i32, %c0_i32_0 : i32, i32
  }
  func.func @transform_3(%arg0: i32) -> (i32, i32) {
    %c0_i32 = arith.constant 0 : i32
    %c0_i32_0 = arith.constant 0 : i32
    return %c0_i32, %arg0 : i32, i32
  }
}

module attributes {stable_mosaic.version = 11 : i64} {
  func.func @_conv_gemm_kernel(%arg0: i32, %arg1: memref<4x4xf32, #tpu.memory_space<vmem>>, %arg2: memref<4x512xf32, #tpu.memory_space<vmem>>, %arg3: memref<4x1xf32, #tpu.memory_space<vmem>>, %arg4: memref<4x512xf32, #tpu.memory_space<vmem>>) attributes {dimension_semantics = [#tpu.dimension_semantics<parallel>], iteration_bounds = array<i64: 1>, scalar_prefetch = 0 : i64, scratch_operands = 0 : i64, tpu.core_type = #tpu.core_type<tc>, window_params = [{pipeline_mode = #tpu.pipeline_mode<synchronous>, transform_indices = @transform_0, window_bounds = array<i64: 4, 4>}, {transform_indices = @transform_1, window_bounds = array<i64: 4, 512>}, {pipeline_mode = #tpu.pipeline_mode<synchronous>, transform_indices = @transform_2, window_bounds = array<i64: 4, 1>}, {transform_indices = @transform_3, window_bounds = array<i64: 4, 512>}]} {
    %c0 = arith.constant 0 : index
    %c0_0 = arith.constant 0 : index
    %0 = vector.load %arg1[%c0, %c0_0] : memref<4x4xf32, #tpu.memory_space<vmem>>, vector<4x4xf32>
    %c0_1 = arith.constant 0 : index
    %c0_2 = arith.constant 0 : index
    %1 = vector.load %arg2[%c0_1, %c0_2] : memref<4x512xf32, #tpu.memory_space<vmem>>, vector<4x512xf32>
    %cst = arith.constant dense<0.000000e+00> : vector<4x512xf32>
    %2 = tpu.matmul %0, %1, %cst {dimension_numbers = #tpu.dot_dimension_numbers<[1], [0], [0], [1], [0, 0, 1, 1], [], []>} : vector<4x4xf32>, vector<4x512xf32>, vector<4x512xf32> -> vector<4x512xf32>
    %c0_3 = arith.constant 0 : index
    %c0_4 = arith.constant 0 : index
    %3 = vector.load %arg3[%c0_3, %c0_4] : memref<4x1xf32, #tpu.memory_space<vmem>>, vector<4x1xf32>
    %4 = vector.broadcast %3 : vector<4x1xf32> to vector<4x512xf32>
    %5 = arith.addf %2, %4 : vector<4x512xf32>
    %c0_5 = arith.constant 0 : index
    %c0_6 = arith.constant 0 : index
    %6 = vector.load %arg4[%c0_5, %c0_6] : memref<4x512xf32, #tpu.memory_space<vmem>>, vector<4x512xf32>
    tpu.vector_store %arg4[%c0_5, %c0_6], %5 {strides = array<i32>} : memref<4x512xf32, #tpu.memory_space<vmem>>, vector<4x512xf32>,
    return
  }
  func.func @transform_0(%arg0: i32) -> (i32, i32) {
    %c0_i32 = arith.constant 0 : i32
    %c0_i32_0 = arith.constant 0 : i32
    %c0_i32_1 = arith.constant 0 : i32
    return %c0_i32, %c0_i32_0 : i32, i32
  }
  func.func @transform_1(%arg0: i32) -> (i32, i32) {
    %c0_i32 = arith.constant 0 : i32
    %c0_i32_0 = arith.constant 0 : i32
    return %c0_i32, %arg0 : i32, i32
  }
  func.func @transform_2(%arg0: i32) -> (i32, i32) {
    %c0_i32 = arith.constant 0 : i32
    %c0_i32_0 = arith.constant 0 : i32
    %c0_i32_1 = arith.constant 0 : i32
    return %c0_i32, %c0_i32_0 : i32, i32
  }
  func.func @transform_3(%arg0: i32) -> (i32, i32) {
    %c0_i32 = arith.constant 0 : i32
    %c0_i32_0 = arith.constant 0 : i32
    return %c0_i32, %arg0 : i32, i32
  }
}

</mosaic_0001>

<llo_original>
// kernel: mgrl_block_forward.7
$region0: #{mgrl_block_forward.7}
  #allocation0 [shape = 'u32[]', space=smem, size = 0x4, offset = 0x4, fixed_abs, tag = 'smem constant byte address 0x4 - core index']
  #allocation1 [shape = 'u32[144,128]{1,0:T(1,128)}', space=vmem, size = 0x12000, scoped, tag = 'internal scratch']
  %s0 = inlined_call_operand.vmem [shape: f32[4,36], index: 0, kind: input, shape index: {}]
  %s1 = inlined_call_operand.vmem [shape: f32[36,2048], index: 1, kind: input, shape index: {}]
  %s2 = inlined_call_operand.vmem [shape: f32[4,1], index: 2, kind: input, shape index: {}]
  %s3 = inlined_call_operand.vmem [shape: f32[4,2048], index: 3, kind: output, shape index: {}]
  %s4 = sld [smem:[#allocation0]]
  $region68: #{mgrl_block_forward.7} parent=0
    _
  %s6 = ssub.s32 1, %s4
  %s7 = scalar_select 0, %s6, %s4
  $region1: #{mgrl_block_forward.7} parent=0
    #allocation2 [shape = 'u8[327680]{0}', space=vmem, size = 0x50000, scoped, tag = 'input window, operand 1']
    loop: start=0, step=1, limit=4
    $region2: #{mgrl_block_forward.7} parent=1 // loop_pre_header
      _
    $region3: #{mgrl_block_forward.7} parent=1 // loop_header
      %s9 = sphi 0, %s13
      %p10 = scmp.ge.s32.totalorder %s9, 4
      %s17 = sphi 0, %s17
      %s19 = sphi 0, %s17
      %s20 = sphi 0, %s19
      %s34 = sphi 0, %s20
      %s40 = sphi 0, %s42
      %s43 = sphi 0, %s40
      %s44 = sphi 0, %s43
      %s60 = sphi 0, %s44
      %s64 = sphi 0, %s64
      %s66 = sphi 0, %s64
      %s67 = sphi 0, %s66
      %s81 = sphi 0, %s67
      %s87 = sphi 0, %s89
      %s90 = sphi 0, %s87
      %s91 = sphi 0, %s90
      %s107 = sphi 0, %s91
    $region4: #{mgrl_block_forward.7} parent=1 // loop_header_branch
      %12 = sbr.rel (%p10) target = $region8
    $region5: #{mgrl_block_forward.7} parent=1 // loop_body
      %s14 = ssub.s32 %s9, 1
      %s15 = ssub.s32 %s9, 2
      %s16 = sadd.s32 %s9, 1
      %s18 = sadd.s32 %s17, 1
      %p21 = scmp.eq.s32.totalorder %s9, 1
      %p22 = scmp.ne.s32.totalorder %s17, %s19
      %p23 = scmp.eq.s32.totalorder %s9, 0
      %p24 = por %p22, %p23
      %p25 = scmp.ne.s32.totalorder %s17, %s19
      %p26 = scmp.eq.s32.totalorder %s14, 1
      %p27 = por %p25, %p26
      %p28 = scmp.ne.s32.totalorder %s19, %s20
      %p29 = scmp.eq.s32.totalorder %s14, 0
      %p30 = por %p28, %p29
      %p31 = scmp.ne.s32.totalorder %s19, %s20
      %p32 = scmp.eq.s32.totalorder %s15, 1
      %p33 = por %p31, %p32
      %p35 = scmp.ne.s32.totalorder %s20, %s34
      %p36 = scmp.eq.s32.totalorder %s15, 0
      %p37 = por %p35, %p36
      %s38 = ssub.s32 %s9, %s16
      %p39 = scmp.eq.s32.totalorder %s38, 0
      %s41 = sadd.s32 %s40, 1
      %s42 = scalar_select %p39, %s40, %s41
      %p45 = pneg %p39
      %p46 = scmp.eq.s32.totalorder %s9, 1
      %p47 = por %p45, %p46
      %p48 = scmp.ne.s32.totalorder %s40, %s43
      %p49 = scmp.eq.s32.totalorder %s9, 0
      %p50 = por %p48, %p49
      %p51 = scmp.ne.s32.totalorder %s40, %s43
      %p52 = scmp.eq.s32.totalorder %s14, 1
      %p53 = por %p51, %p52
      %p54 = scmp.ne.s32.totalorder %s43, %s44
      %p55 = scmp.eq.s32.totalorder %s14, 0
      %p56 = por %p54, %p55
      %p57 = scmp.ne.s32.totalorder %s43, %s44
      %p58 = scmp.eq.s32.totalorder %s15, 1
      %p59 = por %p57, %p58
      %p61 = scmp.ne.s32.totalorder %s44, %s60
      %p62 = scmp.eq.s32.totalorder %s15, 0
      %p63 = por %p61, %p62
      %s65 = sadd.s32 %s64, 1
      %p68 = scmp.eq.s32.totalorder %s9, 1
      %p69 = scmp.ne.s32.totalorder %s64, %s66
      %p70 = scmp.eq.s32.totalorder %s9, 0
      %p71 = por %p69, %p70
      %p72 = scmp.ne.s32.totalorder %s64, %s66
      %p73 = scmp.eq.s32.totalorder %s14, 1
      %p74 = por %p72, %p73
      %p75 = scmp.ne.s32.totalorder %s66, %s67
      %p76 = scmp.eq.s32.totalorder %s14, 0
      %p77 = por %p75, %p76
      %p78 = scmp.ne.s32.totalorder %s66, %s67
      %p79 = scmp.eq.s32.totalorder %s15, 1
      %p80 = por %p78, %p79
      %p82 = scmp.ne.s32.totalorder %s67, %s81
      %p83 = scmp.eq.s32.totalorder %s15, 0
      %p84 = por %p82, %p83
      %s85 = ssub.s32 %s9, %s16
      %p86 = scmp.eq.s32.totalorder %s85, 0
      %s88 = sadd.s32 %s87, 1
      %s89 = scalar_select %p86, %s87, %s88
      %p92 = pneg %p86
      %p93 = scmp.eq.s32.totalorder %s9, 1
      %p94 = por %p92, %p93
      %p95 = scmp.ne.s32.totalorder %s87, %s90
      %p96 = scmp.eq.s32.totalorder %s9, 0
      %p97 = por %p95, %p96
      %p98 = scmp.ne.s32.totalorder %s87, %s90
      %p99 = scmp.eq.s32.totalorder %s14, 1
      %p100 = por %p98, %p99
      %p101 = scmp.ne.s32.totalorder %s90, %s91
      %p102 = scmp.eq.s32.totalorder %s14, 0
      %p103 = por %p101, %p102
      %p104 = scmp.ne.s32.totalorder %s90, %s91
      %p105 = scmp.eq.s32.totalorder %s15, 1
      %p106 = por %p104, %p105
      %p108 = scmp.ne.s32.totalorder %s91, %s107
      %p109 = scmp.eq.s32.totalorder %s15, 0
      %p110 = por %p108, %p109
      %p111 = scmp.le.s32.totalorder 1, %s9
      %p112 = scmp.lt.s32.totalorder %s9, 3
      %p113 = pnand %p111, %p112
      %p114 = pneg %p113
      // Predicated region
      $region9: #{mgrl_block_forward.7} parent=5 // pred_check
        _
      $region10: #{mgrl_block_forward.7} parent=5 // pred_check_branch
        %116 = sbr.rel (%p113) target = $region12
      $region11: #{mgrl_block_forward.7} parent=5 // pred_region
        %s117 = ssub.s32 %s9, 1
        // Predicated region
        $region13: #{mgrl_block_forward.7} parent=11 // pred_check
          %p118 = pneg %p30
        $region14: #{mgrl_block_forward.7} parent=11 // pred_check_branch
          %120 = sbr.rel (%p118) target = $region16
        $region15: #{mgrl_block_forward.7} parent=11 // pred_region
          _
        $region16: #{mgrl_block_forward.7} parent=11 // pred_fallthru
          _
        // Predicated region
        $region17: #{mgrl_block_forward.7} parent=11 // pred_check
          %p121 = pneg %p77
        $region18: #{mgrl_block_forward.7} parent=11 // pred_check_branch
          %123 = sbr.rel (%p121) target = $region20
        $region19: #{mgrl_block_forward.7} parent=11 // pred_region
          _
        $region20: #{mgrl_block_forward.7} parent=11 // pred_fallthru
          _
      $region12: #{mgrl_block_forward.7} parent=5 // pred_fallthru
        _
      %p124 = scmp.lt.s32.totalorder %s9, 2
      // Predicated region
      $region21: #{mgrl_block_forward.7} parent=5 // pred_check
        %p125 = pneg %p124
      $region22: #{mgrl_block_forward.7} parent=5 // pred_check_branch
        %127 = sbr.rel (%p125) target = $region24
      $region23: #{mgrl_block_forward.7} parent=5 // pred_region
        // Predicated region
        $region25: #{mgrl_block_forward.7} parent=23 // pred_check
          %p128 = pneg %p50
        $region26: #{mgrl_block_forward.7} parent=23 // pred_check_branch
          %130 = sbr.rel (%p128) target = $region28
        $region27: #{mgrl_block_forward.7} parent=23 // pred_region
          %s131 = sand.u32 %s40, 1
          %s132 = sand.u32 %s40, 1
          %s133 = smul.addr %s132, 320
          %s134 = scalar_lea.vmem [#allocation2], %s133
          %s135 = smul.u32 8, %s9
          %s136 = smul.addr %s135, 8
          %s137 = scalar_lea.vmem %s1, %s136
          // Predicated region
          $region29: #{mgrl_block_forward.7} parent=27 // pred_check
            _
          $region30: #{mgrl_block_forward.7} parent=27 // pred_check_branch
            %139 = sbr.rel (0) target = $region32
          $region31: #{mgrl_block_forward.7} parent=27 // pred_region
            // Predicated region
            $region33: #{mgrl_block_forward.7} parent=31 // pred_check
              _
            $region34: #{mgrl_block_forward.7} parent=31 // pred_check_branch
              %141 = sbr.rel (0) target = $region36
            $region35: #{mgrl_block_forward.7} parent=31 // pred_region
              loop: start=0, step=1, limit=1
              $region37: #{mgrl_block_forward.7} parent=35 // loop_pre_header
                _
              $region38: #{mgrl_block_forward.7} parent=35 // loop_header
                %s143 = sphi 0, %s147
                %p144 = scmp.ge.s32.totalorder %s143, 1
                %s148 = sphi %s137, %s137
                %s149 = sphi %s134, %s134
              $region39: #{mgrl_block_forward.7} parent=35 // loop_header_branch
                %146 = sbr.rel (%p144) target = $region43
              $region40: #{mgrl_block_forward.7} parent=35 // loop_body
                %v150 = vld [vmem:[%s148] sm:$0xff]
                %151 = vst [vmem:[%s149] sm:$0xff] %v150
                %v152 = vld [vmem:[%s148 + $0x8] sm:$0xff]
                %153 = vst [vmem:[%s149 + $0x8] sm:$0xff] %v152
                %v154 = vld [vmem:[%s148 + $0x10] sm:$0xff]
                %155 = vst [vmem:[%s149 + $0x10] sm:$0xff] %v154
                %v156 = vld [vmem:[%s148 + $0x18] sm:$0xff]
                %157 = vst [vmem:[%s149 + $0x18] sm:$0xff] %v156
                %v158 = vld [vmem:[%s148 + $0x20] sm:$0xff]
                %159 = vst [vmem:[%s149 + $0x20] sm:$0xff] %v158
                %v160 = vld [vmem:[%s148 + $0x28] sm:$0xff]
                %161 = vst [vmem:[%s149 + $0x28] sm:$0xff] %v160
                %v162 = vld [vmem:[%s148 + $0x30] sm:$0xff]
                %163 = vst [vmem:[%s149 + $0x30] sm:$0xff] %v162
                %v164 = vld [vmem:[%s148 + $0x38] sm:$0xff]
                %165 = vst [vmem:[%s149 + $0x38] sm:$0xff] %v164
                %v166 = vld [vmem:[%s148 + $0x80] sm:$0xff]
                %167 = vst [vmem:[%s149 + $0x40] sm:$0xff] %v166
                %v168 = vld [vmem:[%s148 + $0x88] sm:$0xff]
                %169 = vst [vmem:[%s149 + $0x48] sm:$0xff] %v168
                %v170 = vld [vmem:[%s148 + $0x90] sm:$0xff]
                %171 = vst [vmem:[%s149 + $0x50] sm:$0xff] %v170
                %v172 = vld [vmem:[%s148 + $0x98] sm:$0xff]
                %173 = vst [vmem:[%s149 + $0x58] sm:$0xff] %v172
                %v174 = vld [vmem:[%s148 + $0xa0] sm:$0xff]
                %175 = vst [vmem:[%s149 + $0x60] sm:$0xff] %v174
                %v176 = vld [vmem:[%s148 + $0xa8] sm:$0xff]
                %177 = vst [vmem:[%s149 + $0x68] sm:$0xff] %v176
                %v178 = vld [vmem:[%s148 + $0xb0] sm:$0xff]
                %179 = vst [vmem:[%s149 + $0x70] sm:$0xff] %v178
                %v180 = vld [vmem:[%s148 + $0xb8] sm:$0xff]
                %181 = vst [vmem:[%s149 + $0x78] sm:$0xff] %v180
                %v182 = vld [vmem:[%s148 + $0x100] sm:$0xff]
                %183 = vst [vmem:[%s149 + $0x80] sm:$0xff] %v182
                %v184 = vld [vmem:[%s148 + $0x108] sm:$0xff]
                %185 = vst [vmem:[%s149 + $0x88] sm:$0xff] %v184
                %v186 = vld [vmem:[%s148 + $0x110] sm:$0xff]
                %187 = vst [vmem:[%s149 + $0x90] sm:$0xff] %v186
                %v188 = vld [vmem:[%s148 + $0x118] sm:$0xff]
                %189 = vst [vmem:[%s149 + $0x98] sm:$0xff] %v188
                %v190 = vld [vmem:[%s148 + $0x120] sm:$0xff]
                %191 = vst [vmem:[%s149 + $0xa0] sm:$0xff] %v190
                %v192 = vld [vmem:[%s148 + $0x128] sm:$0xff]
                %193 = vst [vmem:[%s149 + $0xa8] sm:$0xff] %v192
                %v194 = vld [vmem:[%s148 + $0x130] sm:$0xff]
                %195 = vst [vmem:[%s149 + $0xb0] sm:$0xff] %v194
                %v196 = vld [vmem:[%s148 + $0x138] sm:$0xff]
                %197 = vst [vmem:[%s149 + $0xb8] sm:$0xff] %v196
                %v198 = vld [vmem:[%s148 + $0x180] sm:$0xff]
                %199 = vst [vmem:[%s149 + $0xc0] sm:$0xff] %v198
                %v200 = vld [vmem:[%s148 + $0x188] sm:$0xff]
                %201 = vst [vmem:[%s149 + $0xc8] sm:$0xff] %v200
                %v202 = vld [vmem:[%s148 + $0x190] sm:$0xff]
                %203 = vst [vmem:[%s149 + $0xd0] sm:$0xff] %v202
                %v204 = vld [vmem:[%s148 + $0x198] sm:$0xff]
                %205 = vst [vmem:[%s149 + $0xd8] sm:$0xff] %v204
                %v206 = vld [vmem:[%s148 + $0x1a0] sm:$0xff]
                %207 = vst [vmem:[%s149 + $0xe0] sm:$0xff] %v206
                %v208 = vld [vmem:[%s148 + $0x1a8] sm:$0xff]
                %209 = vst [vmem:[%s149 + $0xe8] sm:$0xff] %v208
                %v210 = vld [vmem:[%s148 + $0x1b0] sm:$0xff]
                %211 = vst [vmem:[%s149 + $0xf0] sm:$0xff] %v210
                %v212 = vld [vmem:[%s148 + $0x1b8] sm:$0xff]
                %213 = vst [vmem:[%s149 + $0xf8] sm:$0xff] %v212
                %v214 = vld [vmem:[%s148 + $0x200] sm:$0xff]
                %215 = vst [vmem:[%s149 + $0x100] sm:$0xff] %v214
                %v216 = vld [vmem:[%s148 + $0x208] sm:$0xff]
                %217 = vst [vmem:[%s149 + $0x108] sm:$0xff] %v216
                %v218 = vld [vmem:[%s148 + $0x210] sm:$0xff]
                %219 = vst [vmem:[%s149 + $0x110] sm:$0xff] %v218
                %v220 = vld [vmem:[%s148 + $0x218] sm:$0xff]
                %221 = vst [vmem:[%s149 + $0x118] sm:$0xff] %v220
                %v222 = vld [vmem:[%s148 + $0x220] sm:$0xff]
                %223 = vst [vmem:[%s149 + $0x120] sm:$0xff] %v222
                %v224 = vld [vmem:[%s148 + $0x228] sm:$0xff]
                %225 = vst [vmem:[%s149 + $0x128] sm:$0xff] %v224
                %v226 = vld [vmem:[%s148 + $0x230] sm:$0xff]
                %227 = vst [vmem:[%s149 + $0x130] sm:$0xff] %v226
                %v228 = vld [vmem:[%s148 + $0x238] sm:$0xff]
                %229 = vst [vmem:[%s149 + $0x138] sm:$0xff] %v228
              $region41: #{mgrl_block_forward.7} parent=35 // loop_footer
                %s147 = sadd.s32 1, %s143
              $region42: #{mgrl_block_forward.7} parent=35 // loop_footer_branch
                %142 = sbr.rel target = $region38
              $region43: #{mgrl_block_forward.7} parent=35 // loop_exit
                _
            $region36: #{mgrl_block_forward.7} parent=31 // pred_fallthru
              _
            // Predicated region
            $region44: #{mgrl_block_forward.7} parent=31 // pred_check
              _
            $region45: #{mgrl_block_forward.7} parent=31 // pred_check_branch
              %231 = sbr.rel target = $region47
            $region46: #{mgrl_block_forward.7} parent=31 // pred_region
              _
            $region47: #{mgrl_block_forward.7} parent=31 // pred_fallthru
              _
          $region32: #{mgrl_block_forward.7} parent=27 // pred_fallthru
            _
          %232 = vnop
        $region28: #{mgrl_block_forward.7} parent=23 // pred_fallthru
          _
      $region24: #{mgrl_block_forward.7} parent=5 // pred_fallthru
        _
      %p233 = scmp.le.s32.totalorder 1, %s9
      %p234 = scmp.lt.s32.totalorder %s9, 3
      %p235 = pnand %p233, %p234
      %p236 = pneg %p235
      // Predicated region
      $region48: #{mgrl_block_forward.7} parent=5 // pred_check
        _
      $region49: #{mgrl_block_forward.7} parent=5 // pred_check_branch
        %238 = sbr.rel (%p235) target = $region51
      $region50: #{mgrl_block_forward.7} parent=5 // pred_region
        %s239 = ssub.s32 %s9, 1
        %s240 = sand.u32 %s43, 1
        %s241 = sand.u32 %s43, 1
        %s242 = smul.addr %s241, 320
        %s243 = scalar_lea.vmem [#allocation2], %s242
        // Predicated region
        $region52: #{mgrl_block_forward.7} parent=50 // pred_check
          %p244 = pneg %p56
        $region53: #{mgrl_block_forward.7} parent=50 // pred_check_branch
          %246 = sbr.rel (%p244) target = $region55
        $region54: #{mgrl_block_forward.7} parent=50 // pred_region
          _
        $region55: #{mgrl_block_forward.7} parent=50 // pred_fallthru
          _
        %p247 = pneg %p30
        %p248 = pneg %p27
        %s249 = sand.u32 %s43, 1
        %s250 = sand.u32 %s43, 1
        %s251 = smul.addr %s250, 320
        %s252 = scalar_lea.vmem [#allocation2], %s251
        %p253 = pneg %p56
        %p254 = pneg %p53
        %p255 = pneg %p77
        %p256 = pneg %p74
        %p257 = pneg %p103
        %p258 = pneg %p100
        %s259 = smul.u32 8, %s14
        %p260 = scmp.lt.s32.totalorder %s259, 15
        %s261 = scalar_select %p260, %s259, 15
        %s262 = smul.addr %s261, 4
        %s263 = scalar_lea.vmem %s3, %s262
        %s264 = smul.u32 8, %s14
        %s265 = smul.u32 8, %s14
        %p266 = scmp.lt.s32.totalorder %s265, 15
        %s267 = scalar_select %p266, %s265, 15
        %s268 = smul.addr %s267, 4
        %s269 = scalar_lea.vmem %s3, %s268
        %s270 = smul.u32 8, %s14
        %v271 = vld [vmem:[%s0] sm:$0xf]
        %v272 = vld [vmem:[%s243] sm:$0xff]
        %v273 = vld [vmem:[%s243 + $0x8] sm:$0xff]
        %v274 = vld [vmem:[%s243 + $0x10] sm:$0xff]
        %v275 = vld [vmem:[%s243 + $0x18] sm:$0xff]
        %v276 = vld [vmem:[%s243 + $0x20] sm:$0xff]
        %v277 = vld [vmem:[%s243 + $0x28] sm:$0xff]
        %v278 = vld [vmem:[%s243 + $0x30] sm:$0xff]
        %v279 = vld [vmem:[%s243 + $0x38] sm:$0xff]
        %v280 = vld [vmem:[%s243 + $0x40] sm:$0xff]
        %v281 = vld [vmem:[%s243 + $0x48] sm:$0xff]
        %v282 = vld [vmem:[%s243 + $0x50] sm:$0xff]
        %v283 = vld [vmem:[%s243 + $0x58] sm:$0xff]
        %v284 = vld [vmem:[%s243 + $0x60] sm:$0xff]
        %v285 = vld [vmem:[%s243 + $0x68] sm:$0xff]
        %v286 = vld [vmem:[%s243 + $0x70] sm:$0xff]
        %v287 = vld [vmem:[%s243 + $0x78] sm:$0xff]
        %v288 = vld [vmem:[%s243 + $0x80] sm:$0xff]
        %v289 = vld [vmem:[%s243 + $0x88] sm:$0xff]
        %v290 = vld [vmem:[%s243 + $0x90] sm:$0xff]
        %v291 = vld [vmem:[%s243 + $0x98] sm:$0xff]
        %v292 = vld [vmem:[%s243 + $0xa0] sm:$0xff]
        %v293 = vld [vmem:[%s243 + $0xa8] sm:$0xff]
        %v294 = vld [vmem:[%s243 + $0xb0] sm:$0xff]
        %v295 = vld [vmem:[%s243 + $0xb8] sm:$0xff]
        %v296 = vld [vmem:[%s243 + $0xc0] sm:$0xff]
        %v297 = vld [vmem:[%s243 + $0xc8] sm:$0xff]
        %v298 = vld [vmem:[%s243 + $0xd0] sm:$0xff]
        %v299 = vld [vmem:[%s243 + $0xd8] sm:$0xff]
        %v300 = vld [vmem:[%s243 + $0xe0] sm:$0xff]
        %v301 = vld [vmem:[%s243 + $0xe8] sm:$0xff]
        %v302 = vld [vmem:[%s243 + $0xf0] sm:$0xff]
        %v303 = vld [vmem:[%s243 + $0xf8] sm:$0xff]
        %v304 = vld [vmem:[%s243 + $0x100] sm:$0xf]
        %v305 = vld [vmem:[%s243 + $0x108] sm:$0xf]
        %v306 = vld [vmem:[%s243 + $0x110] sm:$0xf]
        %v307 = vld [vmem:[%s243 + $0x118] sm:$0xf]
        %v308 = vld [vmem:[%s243 + $0x120] sm:$0xf]
        %v309 = vld [vmem:[%s243 + $0x128] sm:$0xf]
        %v310 = vld [vmem:[%s243 + $0x130] sm:$0xf]
        %v311 = vld [vmem:[%s243 + $0x138] sm:$0xf]
        %v312 = vld [vmem:[%s2] sm:$0xf]
        %314 = vset.pattern.permute.xlu0 0
        %315 = vperm.xlu0 %314, %v312
        %v316 = vpop.permute.xlu0 %315
        %vm318 = vcmask 293888
        %v320 = vsel %vm318, %v271, 0
        %vm322 = vcmask 1043456
        %v324 = vsel %vm322, %v304, 0
        %v327 = vsel %vm322, %v305, 0
        %v330 = vsel %vm322, %v306, 0
        %v333 = vsel %vm322, %v307, 0
        %v336 = vsel %vm322, %v308, 0
        %v339 = vsel %vm322, %v309, 0
        %v342 = vsel %vm322, %v310, 0
        %v345 = vsel %vm322, %v311, 0
        %347 = vmatprep.subr.mxu0 0.0
        %348 = vmatpush1.msra.mxu0 0.0
        %349 = vmatprep.subr.mxu0 0.0
        %350 = vmatpush1.msra.mxu0 0.0
        %351 = vmatprep.subr.mxu0 0.0
        %352 = vmatpush1.msra.mxu0 0.0
        %353 = vmatprep.subr.mxu0 0.0
        %354 = vmatpush1.msra.mxu0 0.0
        %355 = vmatprep.subr.mxu0 0.0
        %356 = vmatpush1.msra.mxu0 0.0
        %357 = vmatprep.subr.mxu0 0.0
        %358 = vmatpush1.msra.mxu0 0.0
        %359 = vmatprep.subr.mxu0 0.0
        %360 = vmatpush1.msra.mxu0 0.0
        %361 = vmatprep.subr.mxu0 0.0
        %362 = vmatpush1.msra.mxu0 0.0
        %363 = vmatprep.subr.mxu0 0.0
        %364 = vmatpush1.msra.mxu0 0.0
        %365 = vmatprep.subr.mxu0 0.0
        %366 = vmatpush1.msra.mxu0 0.0
        %367 = vmatprep.subr.mxu0 0.0
        %368 = vmatpush1.msra.mxu0 0.0
        %369 = vmatprep.subr.mxu0 %v327
        %370 = vmatpush1.msra.mxu0 %v324
        %371 = vmatprep.subr.mxu0 %v297
        %372 = vmatpush1.msra.mxu0 %v296
        %373 = vmatprep.subr.mxu0 %v289
        %374 = vmatpush1.msra.mxu0 %v288
        %375 = vmatprep.subr.mxu0 %v281
        %376 = vmatpush1.msra.mxu0 %v280
        %377 = vmatprep.subr.mxu0 %v273
        %378 = vmatpush1.msra.mxu0 %v272
        %379 = vmatprep.subr.mxu0 0.0
        %380 = vmatpush2.msra.mxu0 0.0
        %381 = vmatprep.subr.mxu0 0.0
        %382 = vmatpush2.msra.mxu0 0.0
        %383 = vmatprep.subr.mxu0 0.0
        %384 = vmatpush2.msra.mxu0 0.0
        %385 = vmatprep.subr.mxu0 0.0
        %386 = vmatpush2.msra.mxu0 0.0
        %387 = vmatprep.subr.mxu0 0.0
        %388 = vmatpush2.msra.mxu0 0.0
        %389 = vmatprep.subr.mxu0 0.0
        %390 = vmatpush2.msra.mxu0 0.0
        %391 = vmatprep.subr.mxu0 0.0
        %392 = vmatpush2.msra.mxu0 0.0
        %393 = vmatprep.subr.mxu0 0.0
        %394 = vmatpush2.msra.mxu0 0.0
        %395 = vmatprep.subr.mxu0 0.0
        %396 = vmatpush2.msra.mxu0 0.0
        %397 = vmatprep.subr.mxu0 0.0
        %398 = vmatpush2.msra.mxu0 0.0
        %399 = vmatprep.subr.mxu0 0.0
        %400 = vmatpush2.msra.mxu0 0.0
        %401 = vmatprep.subr.mxu0 0.0
        %402 = vmatpush2.msra.mxu0 0.0
        %403 = vmatprep.subr.mxu0 0.0
        %404 = vmatpush2.msra.mxu0 0.0
        %405 = vmatprep.subr.mxu0 0.0
        %406 = vmatpush2.msra.mxu0 0.0
        %407 = vmatprep.subr.mxu0 0.0
        %408 = vmatpush2.msra.mxu0 0.0
        %409 = vmatprep.subr.mxu0 0.0
        %410 = vmatpush2.msra.mxu0 0.0
        %411 = vmatprep.mubr.f32.mxu0 0.0
        %412 = vmatmul.mubr.f32.gmra.mxu0 %v320
        %v413 = vpop.f32.mrf.mxu0
        %v414 = vadd.f32 %v316, %v413
        %v415 = vpop.f32.mrf.mxu0
        %v416 = vadd.f32 %v316, %v415
        %417 = vdwg.mxu0
        %418 = vmatprep.subr.mxu0 0.0
        %419 = vmatpush1.msra.mxu0 0.0
        %420 = vmatprep.subr.mxu0 0.0
        %421 = vmatpush1.msra.mxu0 0.0
        %422 = vmatprep.subr.mxu0 0.0
        %423 = vmatpush1.msra.mxu0 0.0
        %424 = vmatprep.subr.mxu0 0.0
        %425 = vmatpush1.msra.mxu0 0.0
        %426 = vmatprep.subr.mxu0 0.0
        %427 = vmatpush1.msra.mxu0 0.0
        %428 = vmatprep.subr.mxu0 0.0
        %429 = vmatpush1.msra.mxu0 0.0
        %430 = vmatprep.subr.mxu0 0.0
        %431 = vmatpush1.msra.mxu0 0.0
        %432 = vmatprep.subr.mxu0 0.0
        %433 = vmatpush1.msra.mxu0 0.0
        %434 = vmatprep.subr.mxu0 0.0
        %435 = vmatpush1.msra.mxu0 0.0
        %436 = vmatprep.subr.mxu0 0.0
        %437 = vmatpush1.msra.mxu0 0.0
        %438 = vmatprep.subr.mxu0 0.0
        %439 = vmatpush1.msra.mxu0 0.0
        %440 = vmatprep.subr.mxu0 %v333
        %441 = vmatpush1.msra.mxu0 %v330
        %442 = vmatprep.subr.mxu0 %v299
        %443 = vmatpush1.msra.mxu0 %v298
        %444 = vmatprep.subr.mxu0 %v291
        %445 = vmatpush1.msra.mxu0 %v290
        %446 = vmatprep.subr.mxu0 %v283
        %447 = vmatpush1.msra.mxu0 %v282
        %448 = vmatprep.subr.mxu0 %v275
        %449 = vmatpush1.msra.mxu0 %v274
        %450 = vmatprep.subr.mxu0 0.0
        %451 = vmatpush2.msra.mxu0 0.0
        %452 = vmatprep.subr.mxu0 0.0
        %453 = vmatpush2.msra.mxu0 0.0
        %454 = vmatprep.subr.mxu0 0.0
        %455 = vmatpush2.msra.mxu0 0.0
        %456 = vmatprep.subr.mxu0 0.0
        %457 = vmatpush2.msra.mxu0 0.0
        %458 = vmatprep.subr.mxu0 0.0
        %459 = vmatpush2.msra.mxu0 0.0
        %460 = vmatprep.subr.mxu0 0.0
        %461 = vmatpush2.msra.mxu0 0.0
        %462 = vmatprep.subr.mxu0 0.0
        %463 = vmatpush2.msra.mxu0 0.0
        %464 = vmatprep.subr.mxu0 0.0
        %465 = vmatpush2.msra.mxu0 0.0
        %466 = vmatprep.subr.mxu0 0.0
        %467 = vmatpush2.msra.mxu0 0.0
        %468 = vmatprep.subr.mxu0 0.0
        %469 = vmatpush2.msra.mxu0 0.0
        %470 = vmatprep.subr.mxu0 0.0
        %471 = vmatpush2.msra.mxu0 0.0
        %472 = vmatprep.subr.mxu0 0.0
        %473 = vmatpush2.msra.mxu0 0.0
        %474 = vmatprep.subr.mxu0 0.0
        %475 = vmatpush2.msra.mxu0 0.0
        %476 = vmatprep.subr.mxu0 0.0
        %477 = vmatpush2.msra.mxu0 0.0
        %478 = vmatprep.subr.mxu0 0.0
        %479 = vmatpush2.msra.mxu0 0.0
        %480 = vmatprep.subr.mxu0 0.0
        %481 = vmatpush2.msra.mxu0 0.0
        %482 = vmatprep.mubr.f32.mxu0 0.0
        %483 = vmatmul.mubr.f32.gmra.mxu0 %v320
        %v484 = vpop.f32.mrf.mxu0
        %v485 = vadd.f32 %v316, %v484
        %v486 = vpop.f32.mrf.mxu0
        %v487 = vadd.f32 %v316, %v486
        %488 = vdwg.mxu0
        %489 = vmatprep.subr.mxu0 0.0
        %490 = vmatpush1.msra.mxu0 0.0
        %491 = vmatprep.subr.mxu0 0.0
        %492 = vmatpush1.msra.mxu0 0.0
        %493 = vmatprep.subr.mxu0 0.0
        %494 = vmatpush1.msra.mxu0 0.0
        %495 = vmatprep.subr.mxu0 0.0
        %496 = vmatpush1.msra.mxu0 0.0
        %497 = vmatprep.subr.mxu0 0.0
        %498 = vmatpush1.msra.mxu0 0.0
        %499 = vmatprep.subr.mxu0 0.0
        %500 = vmatpush1.msra.mxu0 0.0
        %501 = vmatprep.subr.mxu0 0.0
        %502 = vmatpush1.msra.mxu0 0.0
        %503 = vmatprep.subr.mxu0 0.0
        %504 = vmatpush1.msra.mxu0 0.0
        %505 = vmatprep.subr.mxu0 0.0
        %506 = vmatpush1.msra.mxu0 0.0
        %507 = vmatprep.subr.mxu0 0.0
        %508 = vmatpush1.msra.mxu0 0.0
        %509 = vmatprep.subr.mxu0 0.0
        %510 = vmatpush1.msra.mxu0 0.0
        %511 = vmatprep.subr.mxu0 %v339
        %512 = vmatpush1.msra.mxu0 %v336
        %513 = vmatprep.subr.mxu0 %v301
        %514 = vmatpush1.msra.mxu0 %v300
        %515 = vmatprep.subr.mxu0 %v293
        %516 = vmatpush1.msra.mxu0 %v292
        %517 = vmatprep.subr.mxu0 %v285
        %518 = vmatpush1.msra.mxu0 %v284
        %519 = vmatprep.subr.mxu0 %v277
        %520 = vmatpush1.msra.mxu0 %v276
        %521 = vmatprep.subr.mxu0 0.0
        %522 = vmatpush2.msra.mxu0 0.0
        %523 = vmatprep.subr.mxu0 0.0
        %524 = vmatpush2.msra.mxu0 0.0
        %525 = vmatprep.subr.mxu0 0.0
        %526 = vmatpush2.msra.mxu0 0.0
        %527 = vmatprep.subr.mxu0 0.0
        %528 = vmatpush2.msra.mxu0 0.0
        %529 = vmatprep.subr.mxu0 0.0
        %530 = vmatpush2.msra.mxu0 0.0
        %531 = vmatprep.subr.mxu0 0.0
        %532 = vmatpush2.msra.mxu0 0.0
        %533 = vmatprep.subr.mxu0 0.0
        %534 = vmatpush2.msra.mxu0 0.0
        %535 = vmatprep.subr.mxu0 0.0
        %536 = vmatpush2.msra.mxu0 0.0
        %537 = vmatprep.subr.mxu0 0.0
        %538 = vmatpush2.msra.mxu0 0.0
        %539 = vmatprep.subr.mxu0 0.0
        %540 = vmatpush2.msra.mxu0 0.0
        %541 = vmatprep.subr.mxu0 0.0
        %542 = vmatpush2.msra.mxu0 0.0
        %543 = vmatprep.subr.mxu0 0.0
        %544 = vmatpush2.msra.mxu0 0.0
        %545 = vmatprep.subr.mxu0 0.0
        %546 = vmatpush2.msra.mxu0 0.0
        %547 = vmatprep.subr.mxu0 0.0
        %548 = vmatpush2.msra.mxu0 0.0
        %549 = vmatprep.subr.mxu0 0.0
        %550 = vmatpush2.msra.mxu0 0.0
        %551 = vmatprep.subr.mxu0 0.0
        %552 = vmatpush2.msra.mxu0 0.0
        %553 = vmatprep.mubr.f32.mxu0 0.0
        %554 = vmatmul.mubr.f32.gmra.mxu0 %v320
        %v555 = vpop.f32.mrf.mxu0
        %v556 = vadd.f32 %v316, %v555
        %v557 = vpop.f32.mrf.mxu0
        %v558 = vadd.f32 %v316, %v557
        %559 = vdwg.mxu0
        %560 = vmatprep.subr.mxu0 0.0
        %561 = vmatpush1.msra.mxu0 0.0
        %562 = vmatprep.subr.mxu0 0.0
        %563 = vmatpush1.msra.mxu0 0.0
        %564 = vmatprep.subr.mxu0 0.0
        %565 = vmatpush1.msra.mxu0 0.0
        %566 = vmatprep.subr.mxu0 0.0
        %567 = vmatpush1.msra.mxu0 0.0
        %568 = vmatprep.subr.mxu0 0.0
        %569 = vmatpush1.msra.mxu0 0.0
        %570 = vmatprep.subr.mxu0 0.0
        %571 = vmatpush1.msra.mxu0 0.0
        %572 = vmatprep.subr.mxu0 0.0
        %573 = vmatpush1.msra.mxu0 0.0
        %574 = vmatprep.subr.mxu0 0.0
        %575 = vmatpush1.msra.mxu0 0.0
        %576 = vmatprep.subr.mxu0 0.0
        %577 = vmatpush1.msra.mxu0 0.0
        %578 = vmatprep.subr.mxu0 0.0
        %579 = vmatpush1.msra.mxu0 0.0
        %580 = vmatprep.subr.mxu0 0.0
        %581 = vmatpush1.msra.mxu0 0.0
        %582 = vmatprep.subr.mxu0 %v345
        %583 = vmatpush1.msra.mxu0 %v342
        %584 = vmatprep.subr.mxu0 %v303
        %585 = vmatpush1.msra.mxu0 %v302
        %586 = vmatprep.subr.mxu0 %v295
        %587 = vmatpush1.msra.mxu0 %v294
        %588 = vmatprep.subr.mxu0 %v287
        %589 = vmatpush1.msra.mxu0 %v286
        %590 = vmatprep.subr.mxu0 %v279
        %591 = vmatpush1.msra.mxu0 %v278
        %592 = vmatprep.subr.mxu0 0.0
        %593 = vmatpush2.msra.mxu0 0.0
        %594 = vmatprep.subr.mxu0 0.0
        %595 = vmatpush2.msra.mxu0 0.0
        %596 = vmatprep.subr.mxu0 0.0
        %597 = vmatpush2.msra.mxu0 0.0
        %598 = vmatprep.subr.mxu0 0.0
        %599 = vmatpush2.msra.mxu0 0.0
        %600 = vmatprep.subr.mxu0 0.0
        %601 = vmatpush2.msra.mxu0 0.0
        %602 = vmatprep.subr.mxu0 0.0
        %603 = vmatpush2.msra.mxu0 0.0
        %604 = vmatprep.subr.mxu0 0.0
        %605 = vmatpush2.msra.mxu0 0.0
        %606 = vmatprep.subr.mxu0 0.0
        %607 = vmatpush2.msra.mxu0 0.0
        %608 = vmatprep.subr.mxu0 0.0
        %609 = vmatpush2.msra.mxu0 0.0
        %610 = vmatprep.subr.mxu0 0.0
        %611 = vmatpush2.msra.mxu0 0.0
        %612 = vmatprep.subr.mxu0 0.0
        %613 = vmatpush2.msra.mxu0 0.0
        %614 = vmatprep.subr.mxu0 0.0
        %615 = vmatpush2.msra.mxu0 0.0
        %616 = vmatprep.subr.mxu0 0.0
        %617 = vmatpush2.msra.mxu0 0.0
        %618 = vmatprep.subr.mxu0 0.0
        %619 = vmatpush2.msra.mxu0 0.0
        %620 = vmatprep.subr.mxu0 0.0
        %621 = vmatpush2.msra.mxu0 0.0
        %622 = vmatprep.subr.mxu0 0.0
        %623 = vmatpush2.msra.mxu0 0.0
        %624 = vmatprep.mubr.f32.mxu0 0.0
        %625 = vmatmul.mubr.f32.gmra.mxu0 %v320
        %v626 = vpop.f32.mrf.mxu0
        %v627 = vadd.f32 %v316, %v626
        %v628 = vpop.f32.mrf.mxu0
        %v629 = vadd.f32 %v316, %v628
        %630 = vdwg.mxu0
        %v639 = vcombine.low %v414, %v416
        %v640 = vcombine.low %v485, %v487
        %v641 = vcombine.low %v556, %v558
        %v642 = vcombine.low %v627, %v629
        %647 = vst [vmem:[%s269] sm:$0xff] %v639
        %648 = vst [vmem:[%s269 + $0x8] sm:$0xff] %v640
        %649 = vst [vmem:[%s269 + $0x10] sm:$0xff] %v641
        %650 = vst [vmem:[%s269 + $0x18] sm:$0xff] %v642
        %s651 = smul.u32 8, %s14
        %p652 = scmp.lt.s32.totalorder %s651, 15
        %s653 = scalar_select %p652, %s651, 15
        %s654 = smul.addr %s653, 4
        %s655 = scalar_lea.vmem %s3, %s654
        // Predicated region
        $region56: #{mgrl_block_forward.7} parent=50 // pred_check
          %p656 = pneg %p100
        $region57: #{mgrl_block_forward.7} parent=50 // pred_check_branch
          %658 = sbr.rel (%p656) target = $region59
        $region58: #{mgrl_block_forward.7} parent=50 // pred_region
          %s659 = smul.u32 8, %s14
        $region59: #{mgrl_block_forward.7} parent=50 // pred_fallthru
          _
      $region51: #{mgrl_block_forward.7} parent=5 // pred_fallthru
        _
      %p660 = scmp.le.s32.totalorder 2, %s9
      // Predicated region
      $region60: #{mgrl_block_forward.7} parent=5 // pred_check
        %p661 = pneg %p660
      $region61: #{mgrl_block_forward.7} parent=5 // pred_check_branch
        %663 = sbr.rel (%p661) target = $region63
      $region62: #{mgrl_block_forward.7} parent=5 // pred_region
        %s664 = ssub.s32 %s9, 2
        // Predicated region
        $region64: #{mgrl_block_forward.7} parent=62 // pred_check
          %p665 = pneg %p106
        $region65: #{mgrl_block_forward.7} parent=62 // pred_check_branch
          %667 = sbr.rel (%p665) target = $region67
        $region66: #{mgrl_block_forward.7} parent=62 // pred_region
          %s668 = smul.u32 8, %s15
          %p669 = scmp.lt.s32.totalorder %s668, 15
          %s670 = scalar_select %p669, %s668, 15
          %s671 = smul.addr %s670, 4
          %s672 = scalar_lea.vmem %s3, %s671
        $region67: #{mgrl_block_forward.7} parent=62 // pred_fallthru
          _
      $region63: #{mgrl_block_forward.7} parent=5 // pred_fallthru
        _
    $region6: #{mgrl_block_forward.7} parent=1 // loop_footer
      %s13 = sadd.s32 1, %s9
    $region7: #{mgrl_block_forward.7} parent=1 // loop_footer_branch
      %8 = sbr.rel target = $region3
    $region8: #{mgrl_block_forward.7} parent=1 // loop_exit
      _

// kernel: mgrl_block_forward.8
$region0: #{mgrl_block_forward.8}
  #allocation0 [shape = 'u32[]', space=smem, size = 0x4, offset = 0x4, fixed_abs, tag = 'smem constant byte address 0x4 - core index']
  #allocation1 [shape = 'u32[144,128]{1,0:T(1,128)}', space=vmem, size = 0x12000, scoped, tag = 'internal scratch']
  %s0 = inlined_call_operand.vmem [shape: f32[4,36], index: 0, kind: input, shape index: {}]
  %s1 = inlined_call_operand.vmem [shape: f32[36,8192], index: 1, kind: input, shape index: {}]
  %s2 = inlined_call_operand.vmem [shape: f32[4,1], index: 2, kind: input, shape index: {}]
  %s3 = inlined_call_operand.vmem [shape: f32[4,8192], index: 3, kind: output, shape index: {}]
  %s4 = sld [smem:[#allocation0]]
  $region68: #{mgrl_block_forward.8} parent=0
    _
  %s6 = ssub.s32 1, %s4
  %s7 = scalar_select 0, %s6, %s4
  $region1: #{mgrl_block_forward.8} parent=0
    #allocation2 [shape = 'u8[327680]{0}', space=vmem, size = 0x50000, scoped, tag = 'input window, operand 1']
    loop: start=0, step=1, limit=10
    $region2: #{mgrl_block_forward.8} parent=1 // loop_pre_header
      _
    $region3: #{mgrl_block_forward.8} parent=1 // loop_header
      %s9 = sphi 0, %s13
      %p10 = scmp.ge.s32.totalorder %s9, 10
      %s17 = sphi 0, %s17
      %s19 = sphi 0, %s17
      %s20 = sphi 0, %s19
      %s34 = sphi 0, %s20
      %s40 = sphi 0, %s42
      %s43 = sphi 0, %s40
      %s44 = sphi 0, %s43
      %s60 = sphi 0, %s44
      %s64 = sphi 0, %s64
      %s66 = sphi 0, %s64
      %s67 = sphi 0, %s66
      %s81 = sphi 0, %s67
      %s87 = sphi 0, %s89
      %s90 = sphi 0, %s87
      %s91 = sphi 0, %s90
      %s107 = sphi 0, %s91
    $region4: #{mgrl_block_forward.8} parent=1 // loop_header_branch
      %12 = sbr.rel (%p10) target = $region8
    $region5: #{mgrl_block_forward.8} parent=1 // loop_body
      %s14 = ssub.s32 %s9, 1
      %s15 = ssub.s32 %s9, 2
      %s16 = sadd.s32 %s9, 1
      %s18 = sadd.s32 %s17, 1
      %p21 = scmp.eq.s32.totalorder %s9, 7
      %p22 = scmp.ne.s32.totalorder %s17, %s19
      %p23 = scmp.eq.s32.totalorder %s9, 0
      %p24 = por %p22, %p23
      %p25 = scmp.ne.s32.totalorder %s17, %s19
      %p26 = scmp.eq.s32.totalorder %s14, 7
      %p27 = por %p25, %p26
      %p28 = scmp.ne.s32.totalorder %s19, %s20
      %p29 = scmp.eq.s32.totalorder %s14, 0
      %p30 = por %p28, %p29
      %p31 = scmp.ne.s32.totalorder %s19, %s20
      %p32 = scmp.eq.s32.totalorder %s15, 7
      %p33 = por %p31, %p32
      %p35 = scmp.ne.s32.totalorder %s20, %s34
      %p36 = scmp.eq.s32.totalorder %s15, 0
      %p37 = por %p35, %p36
      %s38 = ssub.s32 %s9, %s16
      %p39 = scmp.eq.s32.totalorder %s38, 0
      %s41 = sadd.s32 %s40, 1
      %s42 = scalar_select %p39, %s40, %s41
      %p45 = pneg %p39
      %p46 = scmp.eq.s32.totalorder %s9, 7
      %p47 = por %p45, %p46
      %p48 = scmp.ne.s32.totalorder %s40, %s43
      %p49 = scmp.eq.s32.totalorder %s9, 0
      %p50 = por %p48, %p49
      %p51 = scmp.ne.s32.totalorder %s40, %s43
      %p52 = scmp.eq.s32.totalorder %s14, 7
      %p53 = por %p51, %p52
      %p54 = scmp.ne.s32.totalorder %s43, %s44
      %p55 = scmp.eq.s32.totalorder %s14, 0
      %p56 = por %p54, %p55
      %p57 = scmp.ne.s32.totalorder %s43, %s44
      %p58 = scmp.eq.s32.totalorder %s15, 7
      %p59 = por %p57, %p58
      %p61 = scmp.ne.s32.totalorder %s44, %s60
      %p62 = scmp.eq.s32.totalorder %s15, 0
      %p63 = por %p61, %p62
      %s65 = sadd.s32 %s64, 1
      %p68 = scmp.eq.s32.totalorder %s9, 7
      %p69 = scmp.ne.s32.totalorder %s64, %s66
      %p70 = scmp.eq.s32.totalorder %s9, 0
      %p71 = por %p69, %p70
      %p72 = scmp.ne.s32.totalorder %s64, %s66
      %p73 = scmp.eq.s32.totalorder %s14, 7
      %p74 = por %p72, %p73
      %p75 = scmp.ne.s32.totalorder %s66, %s67
      %p76 = scmp.eq.s32.totalorder %s14, 0
      %p77 = por %p75, %p76
      %p78 = scmp.ne.s32.totalorder %s66, %s67
      %p79 = scmp.eq.s32.totalorder %s15, 7
      %p80 = por %p78, %p79
      %p82 = scmp.ne.s32.totalorder %s67, %s81
      %p83 = scmp.eq.s32.totalorder %s15, 0
      %p84 = por %p82, %p83
      %s85 = ssub.s32 %s9, %s16
      %p86 = scmp.eq.s32.totalorder %s85, 0
      %s88 = sadd.s32 %s87, 1
      %s89 = scalar_select %p86, %s87, %s88
      %p92 = pneg %p86
      %p93 = scmp.eq.s32.totalorder %s9, 7
      %p94 = por %p92, %p93
      %p95 = scmp.ne.s32.totalorder %s87, %s90
      %p96 = scmp.eq.s32.totalorder %s9, 0
      %p97 = por %p95, %p96
      %p98 = scmp.ne.s32.totalorder %s87, %s90
      %p99 = scmp.eq.s32.totalorder %s14, 7
      %p100 = por %p98, %p99
      %p101 = scmp.ne.s32.totalorder %s90, %s91
      %p102 = scmp.eq.s32.totalorder %s14, 0
      %p103 = por %p101, %p102
      %p104 = scmp.ne.s32.totalorder %s90, %s91
      %p105 = scmp.eq.s32.totalorder %s15, 7
      %p106 = por %p104, %p105
      %p108 = scmp.ne.s32.totalorder %s91, %s107
      %p109 = scmp.eq.s32.totalorder %s15, 0
      %p110 = por %p108, %p109
      %p111 = scmp.le.s32.totalorder 1, %s9
      %p112 = scmp.lt.s32.totalorder %s9, 9
      %p113 = pnand %p111, %p112
      %p114 = pneg %p113
      // Predicated region
      $region9: #{mgrl_block_forward.8} parent=5 // pred_check
        _
      $region10: #{mgrl_block_forward.8} parent=5 // pred_check_branch
        %116 = sbr.rel (%p113) target = $region12
      $region11: #{mgrl_block_forward.8} parent=5 // pred_region
        %s117 = ssub.s32 %s9, 1
        // Predicated region
        $region13: #{mgrl_block_forward.8} parent=11 // pred_check
          %p118 = pneg %p30
        $region14: #{mgrl_block_forward.8} parent=11 // pred_check_branch
          %120 = sbr.rel (%p118) target = $region16
        $region15: #{mgrl_block_forward.8} parent=11 // pred_region
          _
        $region16: #{mgrl_block_forward.8} parent=11 // pred_fallthru
          _
        // Predicated region
        $region17: #{mgrl_block_forward.8} parent=11 // pred_check
          %p121 = pneg %p77
        $region18: #{mgrl_block_forward.8} parent=11 // pred_check_branch
          %123 = sbr.rel (%p121) target = $region20
        $region19: #{mgrl_block_forward.8} parent=11 // pred_region
          _
        $region20: #{mgrl_block_forward.8} parent=11 // pred_fallthru
          _
      $region12: #{mgrl_block_forward.8} parent=5 // pred_fallthru
        _
      %p124 = scmp.lt.s32.totalorder %s9, 8
      // Predicated region
      $region21: #{mgrl_block_forward.8} parent=5 // pred_check
        %p125 = pneg %p124
      $region22: #{mgrl_block_forward.8} parent=5 // pred_check_branch
        %127 = sbr.rel (%p125) target = $region24
      $region23: #{mgrl_block_forward.8} parent=5 // pred_region
        // Predicated region
        $region25: #{mgrl_block_forward.8} parent=23 // pred_check
          %p128 = pneg %p50
        $region26: #{mgrl_block_forward.8} parent=23 // pred_check_branch
          %130 = sbr.rel (%p128) target = $region28
        $region27: #{mgrl_block_forward.8} parent=23 // pred_region
          %s131 = sand.u32 %s40, 1
          %s132 = sand.u32 %s40, 1
          %s133 = smul.addr %s132, 320
          %s134 = scalar_lea.vmem [#allocation2], %s133
          %s135 = smul.u32 8, %s9
          %s136 = smul.addr %s135, 8
          %s137 = scalar_lea.vmem %s1, %s136
          // Predicated region
          $region29: #{mgrl_block_forward.8} parent=27 // pred_check
            _
          $region30: #{mgrl_block_forward.8} parent=27 // pred_check_branch
            %139 = sbr.rel (0) target = $region32
          $region31: #{mgrl_block_forward.8} parent=27 // pred_region
            // Predicated region
            $region33: #{mgrl_block_forward.8} parent=31 // pred_check
              _
            $region34: #{mgrl_block_forward.8} parent=31 // pred_check_branch
              %141 = sbr.rel (0) target = $region36
            $region35: #{mgrl_block_forward.8} parent=31 // pred_region
              loop: start=0, step=1, limit=1
              $region37: #{mgrl_block_forward.8} parent=35 // loop_pre_header
                _
              $region38: #{mgrl_block_forward.8} parent=35 // loop_header
                %s143 = sphi 0, %s147
                %p144 = scmp.ge.s32.totalorder %s143, 1
                %s148 = sphi %s137, %s137
                %s149 = sphi %s134, %s134
              $region39: #{mgrl_block_forward.8} parent=35 // loop_header_branch
                %146 = sbr.rel (%p144) target = $region43
              $region40: #{mgrl_block_forward.8} parent=35 // loop_body
                %v150 = vld [vmem:[%s148] sm:$0xff]
                %151 = vst [vmem:[%s149] sm:$0xff] %v150
                %v152 = vld [vmem:[%s148 + $0x8] sm:$0xff]
                %153 = vst [vmem:[%s149 + $0x8] sm:$0xff] %v152
                %v154 = vld [vmem:[%s148 + $0x10] sm:$0xff]
                %155 = vst [vmem:[%s149 + $0x10] sm:$0xff] %v154
                %v156 = vld [vmem:[%s148 + $0x18] sm:$0xff]
                %157 = vst [vmem:[%s149 + $0x18] sm:$0xff] %v156
                %v158 = vld [vmem:[%s148 + $0x20] sm:$0xff]
                %159 = vst [vmem:[%s149 + $0x20] sm:$0xff] %v158
                %v160 = vld [vmem:[%s148 + $0x28] sm:$0xff]
                %161 = vst [vmem:[%s149 + $0x28] sm:$0xff] %v160
                %v162 = vld [vmem:[%s148 + $0x30] sm:$0xff]
                %163 = vst [vmem:[%s149 + $0x30] sm:$0xff] %v162
                %v164 = vld [vmem:[%s148 + $0x38] sm:$0xff]
                %165 = vst [vmem:[%s149 + $0x38] sm:$0xff] %v164
                %v166 = vld [vmem:[%s148 + $0x200] sm:$0xff]
                %167 = vst [vmem:[%s149 + $0x40] sm:$0xff] %v166
                %v168 = vld [vmem:[%s148 + $0x208] sm:$0xff]
                %169 = vst [vmem:[%s149 + $0x48] sm:$0xff] %v168
                %v170 = vld [vmem:[%s148 + $0x210] sm:$0xff]
                %171 = vst [vmem:[%s149 + $0x50] sm:$0xff] %v170
                %v172 = vld [vmem:[%s148 + $0x218] sm:$0xff]
                %173 = vst [vmem:[%s149 + $0x58] sm:$0xff] %v172
                %v174 = vld [vmem:[%s148 + $0x220] sm:$0xff]
                %175 = vst [vmem:[%s149 + $0x60] sm:$0xff] %v174
                %v176 = vld [vmem:[%s148 + $0x228] sm:$0xff]
                %177 = vst [vmem:[%s149 + $0x68] sm:$0xff] %v176
                %v178 = vld [vmem:[%s148 + $0x230] sm:$0xff]
                %179 = vst [vmem:[%s149 + $0x70] sm:$0xff] %v178
                %v180 = vld [vmem:[%s148 + $0x238] sm:$0xff]
                %181 = vst [vmem:[%s149 + $0x78] sm:$0xff] %v180
                %v182 = vld [vmem:[%s148 + $0x400] sm:$0xff]
                %183 = vst [vmem:[%s149 + $0x80] sm:$0xff] %v182
                %v184 = vld [vmem:[%s148 + $0x408] sm:$0xff]
                %185 = vst [vmem:[%s149 + $0x88] sm:$0xff] %v184
                %v186 = vld [vmem:[%s148 + $0x410] sm:$0xff]
                %187 = vst [vmem:[%s149 + $0x90] sm:$0xff] %v186
                %v188 = vld [vmem:[%s148 + $0x418] sm:$0xff]
                %189 = vst [vmem:[%s149 + $0x98] sm:$0xff] %v188
                %v190 = vld [vmem:[%s148 + $0x420] sm:$0xff]
                %191 = vst [vmem:[%s149 + $0xa0] sm:$0xff] %v190
                %v192 = vld [vmem:[%s148 + $0x428] sm:$0xff]
                %193 = vst [vmem:[%s149 + $0xa8] sm:$0xff] %v192
                %v194 = vld [vmem:[%s148 + $0x430] sm:$0xff]
                %195 = vst [vmem:[%s149 + $0xb0] sm:$0xff] %v194
                %v196 = vld [vmem:[%s148 + $0x438] sm:$0xff]
                %197 = vst [vmem:[%s149 + $0xb8] sm:$0xff] %v196
                %v198 = vld [vmem:[%s148 + $0x600] sm:$0xff]
                %199 = vst [vmem:[%s149 + $0xc0] sm:$0xff] %v198
                %v200 = vld [vmem:[%s148 + $0x608] sm:$0xff]
                %201 = vst [vmem:[%s149 + $0xc8] sm:$0xff] %v200
                %v202 = vld [vmem:[%s148 + $0x610] sm:$0xff]
                %203 = vst [vmem:[%s149 + $0xd0] sm:$0xff] %v202
                %v204 = vld [vmem:[%s148 + $0x618] sm:$0xff]
                %205 = vst [vmem:[%s149 + $0xd8] sm:$0xff] %v204
                %v206 = vld [vmem:[%s148 + $0x620] sm:$0xff]
                %207 = vst [vmem:[%s149 + $0xe0] sm:$0xff] %v206
                %v208 = vld [vmem:[%s148 + $0x628] sm:$0xff]
                %209 = vst [vmem:[%s149 + $0xe8] sm:$0xff] %v208
                %v210 = vld [vmem:[%s148 + $0x630] sm:$0xff]
                %211 = vst [vmem:[%s149 + $0xf0] sm:$0xff] %v210
                %v212 = vld [vmem:[%s148 + $0x638] sm:$0xff]
                %213 = vst [vmem:[%s149 + $0xf8] sm:$0xff] %v212
                %v214 = vld [vmem:[%s148 + $0x800] sm:$0xff]
                %215 = vst [vmem:[%s149 + $0x100] sm:$0xff] %v214
                %v216 = vld [vmem:[%s148 + $0x808] sm:$0xff]
                %217 = vst [vmem:[%s149 + $0x108] sm:$0xff] %v216
                %v218 = vld [vmem:[%s148 + $0x810] sm:$0xff]
                %219 = vst [vmem:[%s149 + $0x110] sm:$0xff] %v218
                %v220 = vld [vmem:[%s148 + $0x818] sm:$0xff]
                %221 = vst [vmem:[%s149 + $0x118] sm:$0xff] %v220
                %v222 = vld [vmem:[%s148 + $0x820] sm:$0xff]
                %223 = vst [vmem:[%s149 + $0x120] sm:$0xff] %v222
                %v224 = vld [vmem:[%s148 + $0x828] sm:$0xff]
                %225 = vst [vmem:[%s149 + $0x128] sm:$0xff] %v224
                %v226 = vld [vmem:[%s148 + $0x830] sm:$0xff]
                %227 = vst [vmem:[%s149 + $0x130] sm:$0xff] %v226
                %v228 = vld [vmem:[%s148 + $0x838] sm:$0xff]
                %229 = vst [vmem:[%s149 + $0x138] sm:$0xff] %v228
              $region41: #{mgrl_block_forward.8} parent=35 // loop_footer
                %s147 = sadd.s32 1, %s143
              $region42: #{mgrl_block_forward.8} parent=35 // loop_footer_branch
                %142 = sbr.rel target = $region38
              $region43: #{mgrl_block_forward.8} parent=35 // loop_exit
                _
            $region36: #{mgrl_block_forward.8} parent=31 // pred_fallthru
              _
            // Predicated region
            $region44: #{mgrl_block_forward.8} parent=31 // pred_check
              _
            $region45: #{mgrl_block_forward.8} parent=31 // pred_check_branch
              %231 = sbr.rel target = $region47
            $region46: #{mgrl_block_forward.8} parent=31 // pred_region
              _
            $region47: #{mgrl_block_forward.8} parent=31 // pred_fallthru
              _
          $region32: #{mgrl_block_forward.8} parent=27 // pred_fallthru
            _
          %232 = vnop
        $region28: #{mgrl_block_forward.8} parent=23 // pred_fallthru
          _
      $region24: #{mgrl_block_forward.8} parent=5 // pred_fallthru
        _
      %p233 = scmp.le.s32.totalorder 1, %s9
      %p234 = scmp.lt.s32.totalorder %s9, 9
      %p235 = pnand %p233, %p234
      %p236 = pneg %p235
      // Predicated region
      $region48: #{mgrl_block_forward.8} parent=5 // pred_check
        _
      $region49: #{mgrl_block_forward.8} parent=5 // pred_check_branch
        %238 = sbr.rel (%p235) target = $region51
      $region50: #{mgrl_block_forward.8} parent=5 // pred_region
        %s239 = ssub.s32 %s9, 1
        %s240 = sand.u32 %s43, 1
        %s241 = sand.u32 %s43, 1
        %s242 = smul.addr %s241, 320
        %s243 = scalar_lea.vmem [#allocation2], %s242
        // Predicated region
        $region52: #{mgrl_block_forward.8} parent=50 // pred_check
          %p244 = pneg %p56
        $region53: #{mgrl_block_forward.8} parent=50 // pred_check_branch
          %246 = sbr.rel (%p244) target = $region55
        $region54: #{mgrl_block_forward.8} parent=50 // pred_region
          _
        $region55: #{mgrl_block_forward.8} parent=50 // pred_fallthru
          _
        %p247 = pneg %p30
        %p248 = pneg %p27
        %s249 = sand.u32 %s43, 1
        %s250 = sand.u32 %s43, 1
        %s251 = smul.addr %s250, 320
        %s252 = scalar_lea.vmem [#allocation2], %s251
        %p253 = pneg %p56
        %p254 = pneg %p53
        %p255 = pneg %p77
        %p256 = pneg %p74
        %p257 = pneg %p103
        %p258 = pneg %p100
        %s259 = smul.u32 8, %s14
        %p260 = scmp.lt.s32.totalorder %s259, 63
        %s261 = scalar_select %p260, %s259, 63
        %s262 = smul.addr %s261, 4
        %s263 = scalar_lea.vmem %s3, %s262
        %s264 = smul.u32 8, %s14
        %s265 = smul.u32 8, %s14
        %p266 = scmp.lt.s32.totalorder %s265, 63
        %s267 = scalar_select %p266, %s265, 63
        %s268 = smul.addr %s267, 4
        %s269 = scalar_lea.vmem %s3, %s268
        %s270 = smul.u32 8, %s14
        %v271 = vld [vmem:[%s0] sm:$0xf]
        %v272 = vld [vmem:[%s243] sm:$0xff]
        %v273 = vld [vmem:[%s243 + $0x8] sm:$0xff]
        %v274 = vld [vmem:[%s243 + $0x10] sm:$0xff]
        %v275 = vld [vmem:[%s243 + $0x18] sm:$0xff]
        %v276 = vld [vmem:[%s243 + $0x20] sm:$0xff]
        %v277 = vld [vmem:[%s243 + $0x28] sm:$0xff]
        %v278 = vld [vmem:[%s243 + $0x30] sm:$0xff]
        %v279 = vld [vmem:[%s243 + $0x38] sm:$0xff]
        %v280 = vld [vmem:[%s243 + $0x40] sm:$0xff]
        %v281 = vld [vmem:[%s243 + $0x48] sm:$0xff]
        %v282 = vld [vmem:[%s243 + $0x50] sm:$0xff]
        %v283 = vld [vmem:[%s243 + $0x58] sm:$0xff]
        %v284 = vld [vmem:[%s243 + $0x60] sm:$0xff]
        %v285 = vld [vmem:[%s243 + $0x68] sm:$0xff]
        %v286 = vld [vmem:[%s243 + $0x70] sm:$0xff]
        %v287 = vld [vmem:[%s243 + $0x78] sm:$0xff]
        %v288 = vld [vmem:[%s243 + $0x80] sm:$0xff]
        %v289 = vld [vmem:[%s243 + $0x88] sm:$0xff]
        %v290 = vld [vmem:[%s243 + $0x90] sm:$0xff]
        %v291 = vld [vmem:[%s243 + $0x98] sm:$0xff]
        %v292 = vld [vmem:[%s243 + $0xa0] sm:$0xff]
        %v293 = vld [vmem:[%s243 + $0xa8] sm:$0xff]
        %v294 = vld [vmem:[%s243 + $0xb0] sm:$0xff]
        %v295 = vld [vmem:[%s243 + $0xb8] sm:$0xff]
        %v296 = vld [vmem:[%s243 + $0xc0] sm:$0xff]
        %v297 = vld [vmem:[%s243 + $0xc8] sm:$0xff]
        %v298 = vld [vmem:[%s243 + $0xd0] sm:$0xff]
        %v299 = vld [vmem:[%s243 + $0xd8] sm:$0xff]
        %v300 = vld [vmem:[%s243 + $0xe0] sm:$0xff]
        %v301 = vld [vmem:[%s243 + $0xe8] sm:$0xff]
        %v302 = vld [vmem:[%s243 + $0xf0] sm:$0xff]
        %v303 = vld [vmem:[%s243 + $0xf8] sm:$0xff]
        %v304 = vld [vmem:[%s243 + $0x100] sm:$0xf]
        %v305 = vld [vmem:[%s243 + $0x108] sm:$0xf]
        %v306 = vld [vmem:[%s243 + $0x110] sm:$0xf]
        %v307 = vld [vmem:[%s243 + $0x118] sm:$0xf]
        %v308 = vld [vmem:[%s243 + $0x120] sm:$0xf]
        %v309 = vld [vmem:[%s243 + $0x128] sm:$0xf]
        %v310 = vld [vmem:[%s243 + $0x130] sm:$0xf]
        %v311 = vld [vmem:[%s243 + $0x138] sm:$0xf]
        %v312 = vld [vmem:[%s2] sm:$0xf]
        %314 = vset.pattern.permute.xlu0 0
        %315 = vperm.xlu0 %314, %v312
        %v316 = vpop.permute.xlu0 %315
        %vm318 = vcmask 293888
        %v320 = vsel %vm318, %v271, 0
        %vm322 = vcmask 1043456
        %v324 = vsel %vm322, %v304, 0
        %v327 = vsel %vm322, %v305, 0
        %v330 = vsel %vm322, %v306, 0
        %v333 = vsel %vm322, %v307, 0
        %v336 = vsel %vm322, %v308, 0
        %v339 = vsel %vm322, %v309, 0
        %v342 = vsel %vm322, %v310, 0
        %v345 = vsel %vm322, %v311, 0
        %347 = vmatprep.subr.mxu0 0.0
        %348 = vmatpush1.msra.mxu0 0.0
        %349 = vmatprep.subr.mxu0 0.0
        %350 = vmatpush1.msra.mxu0 0.0
        %351 = vmatprep.subr.mxu0 0.0
        %352 = vmatpush1.msra.mxu0 0.0
        %353 = vmatprep.subr.mxu0 0.0
        %354 = vmatpush1.msra.mxu0 0.0
        %355 = vmatprep.subr.mxu0 0.0
        %356 = vmatpush1.msra.mxu0 0.0
        %357 = vmatprep.subr.mxu0 0.0
        %358 = vmatpush1.msra.mxu0 0.0
        %359 = vmatprep.subr.mxu0 0.0
        %360 = vmatpush1.msra.mxu0 0.0
        %361 = vmatprep.subr.mxu0 0.0
        %362 = vmatpush1.msra.mxu0 0.0
        %363 = vmatprep.subr.mxu0 0.0
        %364 = vmatpush1.msra.mxu0 0.0
        %365 = vmatprep.subr.mxu0 0.0
        %366 = vmatpush1.msra.mxu0 0.0
        %367 = vmatprep.subr.mxu0 0.0
        %368 = vmatpush1.msra.mxu0 0.0
        %369 = vmatprep.subr.mxu0 %v327
        %370 = vmatpush1.msra.mxu0 %v324
        %371 = vmatprep.subr.mxu0 %v297
        %372 = vmatpush1.msra.mxu0 %v296
        %373 = vmatprep.subr.mxu0 %v289
        %374 = vmatpush1.msra.mxu0 %v288
        %375 = vmatprep.subr.mxu0 %v281
        %376 = vmatpush1.msra.mxu0 %v280
        %377 = vmatprep.subr.mxu0 %v273
        %378 = vmatpush1.msra.mxu0 %v272
        %379 = vmatprep.subr.mxu0 0.0
        %380 = vmatpush2.msra.mxu0 0.0
        %381 = vmatprep.subr.mxu0 0.0
        %382 = vmatpush2.msra.mxu0 0.0
        %383 = vmatprep.subr.mxu0 0.0
        %384 = vmatpush2.msra.mxu0 0.0
        %385 = vmatprep.subr.mxu0 0.0
        %386 = vmatpush2.msra.mxu0 0.0
        %387 = vmatprep.subr.mxu0 0.0
        %388 = vmatpush2.msra.mxu0 0.0
        %389 = vmatprep.subr.mxu0 0.0
        %390 = vmatpush2.msra.mxu0 0.0
        %391 = vmatprep.subr.mxu0 0.0
        %392 = vmatpush2.msra.mxu0 0.0
        %393 = vmatprep.subr.mxu0 0.0
        %394 = vmatpush2.msra.mxu0 0.0
        %395 = vmatprep.subr.mxu0 0.0
        %396 = vmatpush2.msra.mxu0 0.0
        %397 = vmatprep.subr.mxu0 0.0
        %398 = vmatpush2.msra.mxu0 0.0
        %399 = vmatprep.subr.mxu0 0.0
        %400 = vmatpush2.msra.mxu0 0.0
        %401 = vmatprep.subr.mxu0 0.0
        %402 = vmatpush2.msra.mxu0 0.0
        %403 = vmatprep.subr.mxu0 0.0
        %404 = vmatpush2.msra.mxu0 0.0
        %405 = vmatprep.subr.mxu0 0.0
        %406 = vmatpush2.msra.mxu0 0.0
        %407 = vmatprep.subr.mxu0 0.0
        %408 = vmatpush2.msra.mxu0 0.0
        %409 = vmatprep.subr.mxu0 0.0
        %410 = vmatpush2.msra.mxu0 0.0
        %411 = vmatprep.mubr.f32.mxu0 0.0
        %412 = vmatmul.mubr.f32.gmra.mxu0 %v320
        %v413 = vpop.f32.mrf.mxu0
        %v414 = vadd.f32 %v316, %v413
        %v415 = vpop.f32.mrf.mxu0
        %v416 = vadd.f32 %v316, %v415
        %417 = vdwg.mxu0
        %418 = vmatprep.subr.mxu0 0.0
        %419 = vmatpush1.msra.mxu0 0.0
        %420 = vmatprep.subr.mxu0 0.0
        %421 = vmatpush1.msra.mxu0 0.0
        %422 = vmatprep.subr.mxu0 0.0
        %423 = vmatpush1.msra.mxu0 0.0
        %424 = vmatprep.subr.mxu0 0.0
        %425 = vmatpush1.msra.mxu0 0.0
        %426 = vmatprep.subr.mxu0 0.0
        %427 = vmatpush1.msra.mxu0 0.0
        %428 = vmatprep.subr.mxu0 0.0
        %429 = vmatpush1.msra.mxu0 0.0
        %430 = vmatprep.subr.mxu0 0.0
        %431 = vmatpush1.msra.mxu0 0.0
        %432 = vmatprep.subr.mxu0 0.0
        %433 = vmatpush1.msra.mxu0 0.0
        %434 = vmatprep.subr.mxu0 0.0
        %435 = vmatpush1.msra.mxu0 0.0
        %436 = vmatprep.subr.mxu0 0.0
        %437 = vmatpush1.msra.mxu0 0.0
        %438 = vmatprep.subr.mxu0 0.0
        %439 = vmatpush1.msra.mxu0 0.0
        %440 = vmatprep.subr.mxu0 %v333
        %441 = vmatpush1.msra.mxu0 %v330
        %442 = vmatprep.subr.mxu0 %v299
        %443 = vmatpush1.msra.mxu0 %v298
        %444 = vmatprep.subr.mxu0 %v291
        %445 = vmatpush1.msra.mxu0 %v290
        %446 = vmatprep.subr.mxu0 %v283
        %447 = vmatpush1.msra.mxu0 %v282
        %448 = vmatprep.subr.mxu0 %v275
        %449 = vmatpush1.msra.mxu0 %v274
        %450 = vmatprep.subr.mxu0 0.0
        %451 = vmatpush2.msra.mxu0 0.0
        %452 = vmatprep.subr.mxu0 0.0
        %453 = vmatpush2.msra.mxu0 0.0
        %454 = vmatprep.subr.mxu0 0.0
        %455 = vmatpush2.msra.mxu0 0.0
        %456 = vmatprep.subr.mxu0 0.0
        %457 = vmatpush2.msra.mxu0 0.0
        %458 = vmatprep.subr.mxu0 0.0
        %459 = vmatpush2.msra.mxu0 0.0
        %460 = vmatprep.subr.mxu0 0.0
        %461 = vmatpush2.msra.mxu0 0.0
        %462 = vmatprep.subr.mxu0 0.0
        %463 = vmatpush2.msra.mxu0 0.0
        %464 = vmatprep.subr.mxu0 0.0
        %465 = vmatpush2.msra.mxu0 0.0
        %466 = vmatprep.subr.mxu0 0.0
        %467 = vmatpush2.msra.mxu0 0.0
        %468 = vmatprep.subr.mxu0 0.0
        %469 = vmatpush2.msra.mxu0 0.0
        %470 = vmatprep.subr.mxu0 0.0
        %471 = vmatpush2.msra.mxu0 0.0
        %472 = vmatprep.subr.mxu0 0.0
        %473 = vmatpush2.msra.mxu0 0.0
        %474 = vmatprep.subr.mxu0 0.0
        %475 = vmatpush2.msra.mxu0 0.0
        %476 = vmatprep.subr.mxu0 0.0
        %477 = vmatpush2.msra.mxu0 0.0
        %478 = vmatprep.subr.mxu0 0.0
        %479 = vmatpush2.msra.mxu0 0.0
        %480 = vmatprep.subr.mxu0 0.0
        %481 = vmatpush2.msra.mxu0 0.0
        %482 = vmatprep.mubr.f32.mxu0 0.0
        %483 = vmatmul.mubr.f32.gmra.mxu0 %v320
        %v484 = vpop.f32.mrf.mxu0
        %v485 = vadd.f32 %v316, %v484
        %v486 = vpop.f32.mrf.mxu0
        %v487 = vadd.f32 %v316, %v486
        %488 = vdwg.mxu0
        %489 = vmatprep.subr.mxu0 0.0
        %490 = vmatpush1.msra.mxu0 0.0
        %491 = vmatprep.subr.mxu0 0.0
        %492 = vmatpush1.msra.mxu0 0.0
        %493 = vmatprep.subr.mxu0 0.0
        %494 = vmatpush1.msra.mxu0 0.0
        %495 = vmatprep.subr.mxu0 0.0
        %496 = vmatpush1.msra.mxu0 0.0
        %497 = vmatprep.subr.mxu0 0.0
        %498 = vmatpush1.msra.mxu0 0.0
        %499 = vmatprep.subr.mxu0 0.0
        %500 = vmatpush1.msra.mxu0 0.0
        %501 = vmatprep.subr.mxu0 0.0
        %502 = vmatpush1.msra.mxu0 0.0
        %503 = vmatprep.subr.mxu0 0.0
        %504 = vmatpush1.msra.mxu0 0.0
        %505 = vmatprep.subr.mxu0 0.0
        %506 = vmatpush1.msra.mxu0 0.0
        %507 = vmatprep.subr.mxu0 0.0
        %508 = vmatpush1.msra.mxu0 0.0
        %509 = vmatprep.subr.mxu0 0.0
        %510 = vmatpush1.msra.mxu0 0.0
        %511 = vmatprep.subr.mxu0 %v339
        %512 = vmatpush1.msra.mxu0 %v336
        %513 = vmatprep.subr.mxu0 %v301
        %514 = vmatpush1.msra.mxu0 %v300
        %515 = vmatprep.subr.mxu0 %v293
        %516 = vmatpush1.msra.mxu0 %v292
        %517 = vmatprep.subr.mxu0 %v285
        %518 = vmatpush1.msra.mxu0 %v284
        %519 = vmatprep.subr.mxu0 %v277
        %520 = vmatpush1.msra.mxu0 %v276
        %521 = vmatprep.subr.mxu0 0.0
        %522 = vmatpush2.msra.mxu0 0.0
        %523 = vmatprep.subr.mxu0 0.0
        %524 = vmatpush2.msra.mxu0 0.0
        %525 = vmatprep.subr.mxu0 0.0
        %526 = vmatpush2.msra.mxu0 0.0
        %527 = vmatprep.subr.mxu0 0.0
        %528 = vmatpush2.msra.mxu0 0.0
        %529 = vmatprep.subr.mxu0 0.0
        %530 = vmatpush2.msra.mxu0 0.0
        %531 = vmatprep.subr.mxu0 0.0
        %532 = vmatpush2.msra.mxu0 0.0
        %533 = vmatprep.subr.mxu0 0.0
        %534 = vmatpush2.msra.mxu0 0.0
        %535 = vmatprep.subr.mxu0 0.0
        %536 = vmatpush2.msra.mxu0 0.0
        %537 = vmatprep.subr.mxu0 0.0
        %538 = vmatpush2.msra.mxu0 0.0
        %539 = vmatprep.subr.mxu0 0.0
        %540 = vmatpush2.msra.mxu0 0.0
        %541 = vmatprep.subr.mxu0 0.0
        %542 = vmatpush2.msra.mxu0 0.0
        %543 = vmatprep.subr.mxu0 0.0
        %544 = vmatpush2.msra.mxu0 0.0
        %545 = vmatprep.subr.mxu0 0.0
        %546 = vmatpush2.msra.mxu0 0.0
        %547 = vmatprep.subr.mxu0 0.0
        %548 = vmatpush2.msra.mxu0 0.0
        %549 = vmatprep.subr.mxu0 0.0
        %550 = vmatpush2.msra.mxu0 0.0
        %551 = vmatprep.subr.mxu0 0.0
        %552 = vmatpush2.msra.mxu0 0.0
        %553 = vmatprep.mubr.f32.mxu0 0.0
        %554 = vmatmul.mubr.f32.gmra.mxu0 %v320
        %v555 = vpop.f32.mrf.mxu0
        %v556 = vadd.f32 %v316, %v555
        %v557 = vpop.f32.mrf.mxu0
        %v558 = vadd.f32 %v316, %v557
        %559 = vdwg.mxu0
        %560 = vmatprep.subr.mxu0 0.0
        %561 = vmatpush1.msra.mxu0 0.0
        %562 = vmatprep.subr.mxu0 0.0
        %563 = vmatpush1.msra.mxu0 0.0
        %564 = vmatprep.subr.mxu0 0.0
        %565 = vmatpush1.msra.mxu0 0.0
        %566 = vmatprep.subr.mxu0 0.0
        %567 = vmatpush1.msra.mxu0 0.0
        %568 = vmatprep.subr.mxu0 0.0
        %569 = vmatpush1.msra.mxu0 0.0
        %570 = vmatprep.subr.mxu0 0.0
        %571 = vmatpush1.msra.mxu0 0.0
        %572 = vmatprep.subr.mxu0 0.0
        %573 = vmatpush1.msra.mxu0 0.0
        %574 = vmatprep.subr.mxu0 0.0
        %575 = vmatpush1.msra.mxu0 0.0
        %576 = vmatprep.subr.mxu0 0.0
        %577 = vmatpush1.msra.mxu0 0.0
        %578 = vmatprep.subr.mxu0 0.0
        %579 = vmatpush1.msra.mxu0 0.0
        %580 = vmatprep.subr.mxu0 0.0
        %581 = vmatpush1.msra.mxu0 0.0
        %582 = vmatprep.subr.mxu0 %v345
        %583 = vmatpush1.msra.mxu0 %v342
        %584 = vmatprep.subr.mxu0 %v303
        %585 = vmatpush1.msra.mxu0 %v302
        %586 = vmatprep.subr.mxu0 %v295
        %587 = vmatpush1.msra.mxu0 %v294
        %588 = vmatprep.subr.mxu0 %v287
        %589 = vmatpush1.msra.mxu0 %v286
        %590 = vmatprep.subr.mxu0 %v279
        %591 = vmatpush1.msra.mxu0 %v278
        %592 = vmatprep.subr.mxu0 0.0
        %593 = vmatpush2.msra.mxu0 0.0
        %594 = vmatprep.subr.mxu0 0.0
        %595 = vmatpush2.msra.mxu0 0.0
        %596 = vmatprep.subr.mxu0 0.0
        %597 = vmatpush2.msra.mxu0 0.0
        %598 = vmatprep.subr.mxu0 0.0
        %599 = vmatpush2.msra.mxu0 0.0
        %600 = vmatprep.subr.mxu0 0.0
        %601 = vmatpush2.msra.mxu0 0.0
        %602 = vmatprep.subr.mxu0 0.0
        %603 = vmatpush2.msra.mxu0 0.0
        %604 = vmatprep.subr.mxu0 0.0
        %605 = vmatpush2.msra.mxu0 0.0
        %606 = vmatprep.subr.mxu0 0.0
        %607 = vmatpush2.msra.mxu0 0.0
        %608 = vmatprep.subr.mxu0 0.0
        %609 = vmatpush2.msra.mxu0 0.0
        %610 = vmatprep.subr.mxu0 0.0
        %611 = vmatpush2.msra.mxu0 0.0
        %612 = vmatprep.subr.mxu0 0.0
        %613 = vmatpush2.msra.mxu0 0.0
        %614 = vmatprep.subr.mxu0 0.0
        %615 = vmatpush2.msra.mxu0 0.0
        %616 = vmatprep.subr.mxu0 0.0
        %617 = vmatpush2.msra.mxu0 0.0
        %618 = vmatprep.subr.mxu0 0.0
        %619 = vmatpush2.msra.mxu0 0.0
        %620 = vmatprep.subr.mxu0 0.0
        %621 = vmatpush2.msra.mxu0 0.0
        %622 = vmatprep.subr.mxu0 0.0
        %623 = vmatpush2.msra.mxu0 0.0
        %624 = vmatprep.mubr.f32.mxu0 0.0
        %625 = vmatmul.mubr.f32.gmra.mxu0 %v320
        %v626 = vpop.f32.mrf.mxu0
        %v627 = vadd.f32 %v316, %v626
        %v628 = vpop.f32.mrf.mxu0
        %v629 = vadd.f32 %v316, %v628
        %630 = vdwg.mxu0
        %v639 = vcombine.low %v414, %v416
        %v640 = vcombine.low %v485, %v487
        %v641 = vcombine.low %v556, %v558
        %v642 = vcombine.low %v627, %v629
        %647 = vst [vmem:[%s269] sm:$0xff] %v639
        %648 = vst [vmem:[%s269 + $0x8] sm:$0xff] %v640
        %649 = vst [vmem:[%s269 + $0x10] sm:$0xff] %v641
        %650 = vst [vmem:[%s269 + $0x18] sm:$0xff] %v642
        %s651 = smul.u32 8, %s14
        %p652 = scmp.lt.s32.totalorder %s651, 63
        %s653 = scalar_select %p652, %s651, 63
        %s654 = smul.addr %s653, 4
        %s655 = scalar_lea.vmem %s3, %s654
        // Predicated region
        $region56: #{mgrl_block_forward.8} parent=50 // pred_check
          %p656 = pneg %p100
        $region57: #{mgrl_block_forward.8} parent=50 // pred_check_branch
          %658 = sbr.rel (%p656) target = $region59
        $region58: #{mgrl_block_forward.8} parent=50 // pred_region
          %s659 = smul.u32 8, %s14
        $region59: #{mgrl_block_forward.8} parent=50 // pred_fallthru
          _
      $region51: #{mgrl_block_forward.8} parent=5 // pred_fallthru
        _
      %p660 = scmp.le.s32.totalorder 2, %s9
      // Predicated region
      $region60: #{mgrl_block_forward.8} parent=5 // pred_check
        %p661 = pneg %p660
      $region61: #{mgrl_block_forward.8} parent=5 // pred_check_branch
        %663 = sbr.rel (%p661) target = $region63
      $region62: #{mgrl_block_forward.8} parent=5 // pred_region
        %s664 = ssub.s32 %s9, 2
        // Predicated region
        $region64: #{mgrl_block_forward.8} parent=62 // pred_check
          %p665 = pneg %p106
        $region65: #{mgrl_block_forward.8} parent=62 // pred_check_branch
          %667 = sbr.rel (%p665) target = $region67
        $region66: #{mgrl_block_forward.8} parent=62 // pred_region
          %s668 = smul.u32 8, %s15
          %p669 = scmp.lt.s32.totalorder %s668, 63
          %s670 = scalar_select %p669, %s668, 63
          %s671 = smul.addr %s670, 4
          %s672 = scalar_lea.vmem %s3, %s671
        $region67: #{mgrl_block_forward.8} parent=62 // pred_fallthru
          _
      $region63: #{mgrl_block_forward.8} parent=5 // pred_fallthru
        _
    $region6: #{mgrl_block_forward.8} parent=1 // loop_footer
      %s13 = sadd.s32 1, %s9
    $region7: #{mgrl_block_forward.8} parent=1 // loop_footer_branch
      %8 = sbr.rel target = $region3
    $region8: #{mgrl_block_forward.8} parent=1 // loop_exit
      _

// kernel: mgrl_block_forward.9
$region0: #{mgrl_block_forward.9}
  #allocation0 [shape = 'u32[]', space=smem, size = 0x4, offset = 0x4, fixed_abs, tag = 'smem constant byte address 0x4 - core index']
  #allocation1 [shape = 'u32[144,128]{1,0:T(1,128)}', space=vmem, size = 0x12000, scoped, tag = 'internal scratch']
  %s0 = inlined_call_operand.vmem [shape: f32[4,36], index: 0, kind: input, shape index: {}]
  %s1 = inlined_call_operand.vmem [shape: f32[36,29696], index: 1, kind: input, shape index: {}]
  %s2 = inlined_call_operand.vmem [shape: f32[4,1], index: 2, kind: input, shape index: {}]
  %s3 = inlined_call_operand.vmem [shape: f32[4,29696], index: 3, kind: output, shape index: {}]
  %s4 = sld [smem:[#allocation0]]
  $region68: #{mgrl_block_forward.9} parent=0
    _
  %s6 = ssub.s32 1, %s4
  %s7 = scalar_select 0, %s6, %s4
  $region1: #{mgrl_block_forward.9} parent=0
    #allocation2 [shape = 'u8[327680]{0}', space=vmem, size = 0x50000, scoped, tag = 'input window, operand 1']
    loop: start=0, step=1, limit=31
    $region2: #{mgrl_block_forward.9} parent=1 // loop_pre_header
      _
    $region3: #{mgrl_block_forward.9} parent=1 // loop_header
      %s9 = sphi 0, %s13
      %p10 = scmp.ge.s32.totalorder %s9, 31
      %s17 = sphi 0, %s17
      %s19 = sphi 0, %s17
      %s20 = sphi 0, %s19
      %s34 = sphi 0, %s20
      %s40 = sphi 0, %s42
      %s43 = sphi 0, %s40
      %s44 = sphi 0, %s43
      %s60 = sphi 0, %s44
      %s64 = sphi 0, %s64
      %s66 = sphi 0, %s64
      %s67 = sphi 0, %s66
      %s81 = sphi 0, %s67
      %s87 = sphi 0, %s89
      %s90 = sphi 0, %s87
      %s91 = sphi 0, %s90
      %s107 = sphi 0, %s91
    $region4: #{mgrl_block_forward.9} parent=1 // loop_header_branch
      %12 = sbr.rel (%p10) target = $region8
    $region5: #{mgrl_block_forward.9} parent=1 // loop_body
      %s14 = ssub.s32 %s9, 1
      %s15 = ssub.s32 %s9, 2
      %s16 = sadd.s32 %s9, 1
      %s18 = sadd.s32 %s17, 1
      %p21 = scmp.eq.s32.totalorder %s9, 28
      %p22 = scmp.ne.s32.totalorder %s17, %s19
      %p23 = scmp.eq.s32.totalorder %s9, 0
      %p24 = por %p22, %p23
      %p25 = scmp.ne.s32.totalorder %s17, %s19
      %p26 = scmp.eq.s32.totalorder %s14, 28
      %p27 = por %p25, %p26
      %p28 = scmp.ne.s32.totalorder %s19, %s20
      %p29 = scmp.eq.s32.totalorder %s14, 0
      %p30 = por %p28, %p29
      %p31 = scmp.ne.s32.totalorder %s19, %s20
      %p32 = scmp.eq.s32.totalorder %s15, 28
      %p33 = por %p31, %p32
      %p35 = scmp.ne.s32.totalorder %s20, %s34
      %p36 = scmp.eq.s32.totalorder %s15, 0
      %p37 = por %p35, %p36
      %s38 = ssub.s32 %s9, %s16
      %p39 = scmp.eq.s32.totalorder %s38, 0
      %s41 = sadd.s32 %s40, 1
      %s42 = scalar_select %p39, %s40, %s41
      %p45 = pneg %p39
      %p46 = scmp.eq.s32.totalorder %s9, 28
      %p47 = por %p45, %p46
      %p48 = scmp.ne.s32.totalorder %s40, %s43
      %p49 = scmp.eq.s32.totalorder %s9, 0
      %p50 = por %p48, %p49
      %p51 = scmp.ne.s32.totalorder %s40, %s43
      %p52 = scmp.eq.s32.totalorder %s14, 28
      %p53 = por %p51, %p52
      %p54 = scmp.ne.s32.totalorder %s43, %s44
      %p55 = scmp.eq.s32.totalorder %s14, 0
      %p56 = por %p54, %p55
      %p57 = scmp.ne.s32.totalorder %s43, %s44
      %p58 = scmp.eq.s32.totalorder %s15, 28
      %p59 = por %p57, %p58
      %p61 = scmp.ne.s32.totalorder %s44, %s60
      %p62 = scmp.eq.s32.totalorder %s15, 0
      %p63 = por %p61, %p62
      %s65 = sadd.s32 %s64, 1
      %p68 = scmp.eq.s32.totalorder %s9, 28
      %p69 = scmp.ne.s32.totalorder %s64, %s66
      %p70 = scmp.eq.s32.totalorder %s9, 0
      %p71 = por %p69, %p70
      %p72 = scmp.ne.s32.totalorder %s64, %s66
      %p73 = scmp.eq.s32.totalorder %s14, 28
      %p74 = por %p72, %p73
      %p75 = scmp.ne.s32.totalorder %s66, %s67
      %p76 = scmp.eq.s32.totalorder %s14, 0
      %p77 = por %p75, %p76
      %p78 = scmp.ne.s32.totalorder %s66, %s67
      %p79 = scmp.eq.s32.totalorder %s15, 28
      %p80 = por %p78, %p79
      %p82 = scmp.ne.s32.totalorder %s67, %s81
      %p83 = scmp.eq.s32.totalorder %s15, 0
      %p84 = por %p82, %p83
      %s85 = ssub.s32 %s9, %s16
      %p86 = scmp.eq.s32.totalorder %s85, 0
      %s88 = sadd.s32 %s87, 1
      %s89 = scalar_select %p86, %s87, %s88
      %p92 = pneg %p86
      %p93 = scmp.eq.s32.totalorder %s9, 28
      %p94 = por %p92, %p93
      %p95 = scmp.ne.s32.totalorder %s87, %s90
      %p96 = scmp.eq.s32.totalorder %s9, 0
      %p97 = por %p95, %p96
      %p98 = scmp.ne.s32.totalorder %s87, %s90
      %p99 = scmp.eq.s32.totalorder %s14, 28
      %p100 = por %p98, %p99
      %p101 = scmp.ne.s32.totalorder %s90, %s91
      %p102 = scmp.eq.s32.totalorder %s14, 0
      %p103 = por %p101, %p102
      %p104 = scmp.ne.s32.totalorder %s90, %s91
      %p105 = scmp.eq.s32.totalorder %s15, 28
      %p106 = por %p104, %p105
      %p108 = scmp.ne.s32.totalorder %s91, %s107
      %p109 = scmp.eq.s32.totalorder %s15, 0
      %p110 = por %p108, %p109
      %p111 = scmp.le.s32.totalorder 1, %s9
      %p112 = scmp.lt.s32.totalorder %s9, 30
      %p113 = pnand %p111, %p112
      %p114 = pneg %p113
      // Predicated region
      $region9: #{mgrl_block_forward.9} parent=5 // pred_check
        _
      $region10: #{mgrl_block_forward.9} parent=5 // pred_check_branch
        %116 = sbr.rel (%p113) target = $region12
      $region11: #{mgrl_block_forward.9} parent=5 // pred_region
        %s117 = ssub.s32 %s9, 1
        // Predicated region
        $region13: #{mgrl_block_forward.9} parent=11 // pred_check
          %p118 = pneg %p30
        $region14: #{mgrl_block_forward.9} parent=11 // pred_check_branch
          %120 = sbr.rel (%p118) target = $region16
        $region15: #{mgrl_block_forward.9} parent=11 // pred_region
          _
        $region16: #{mgrl_block_forward.9} parent=11 // pred_fallthru
          _
        // Predicated region
        $region17: #{mgrl_block_forward.9} parent=11 // pred_check
          %p121 = pneg %p77
        $region18: #{mgrl_block_forward.9} parent=11 // pred_check_branch
          %123 = sbr.rel (%p121) target = $region20
        $region19: #{mgrl_block_forward.9} parent=11 // pred_region
          _
        $region20: #{mgrl_block_forward.9} parent=11 // pred_fallthru
          _
      $region12: #{mgrl_block_forward.9} parent=5 // pred_fallthru
        _
      %p124 = scmp.lt.s32.totalorder %s9, 29
      // Predicated region
      $region21: #{mgrl_block_forward.9} parent=5 // pred_check
        %p125 = pneg %p124
      $region22: #{mgrl_block_forward.9} parent=5 // pred_check_branch
        %127 = sbr.rel (%p125) target = $region24
      $region23: #{mgrl_block_forward.9} parent=5 // pred_region
        // Predicated region
        $region25: #{mgrl_block_forward.9} parent=23 // pred_check
          %p128 = pneg %p50
        $region26: #{mgrl_block_forward.9} parent=23 // pred_check_branch
          %130 = sbr.rel (%p128) target = $region28
        $region27: #{mgrl_block_forward.9} parent=23 // pred_region
          %s131 = sand.u32 %s40, 1
          %s132 = sand.u32 %s40, 1
          %s133 = smul.addr %s132, 320
          %s134 = scalar_lea.vmem [#allocation2], %s133
          %s135 = smul.u32 8, %s9
          %s136 = smul.addr %s135, 8
          %s137 = scalar_lea.vmem %s1, %s136
          // Predicated region
          $region29: #{mgrl_block_forward.9} parent=27 // pred_check
            _
          $region30: #{mgrl_block_forward.9} parent=27 // pred_check_branch
            %139 = sbr.rel (0) target = $region32
          $region31: #{mgrl_block_forward.9} parent=27 // pred_region
            // Predicated region
            $region33: #{mgrl_block_forward.9} parent=31 // pred_check
              _
            $region34: #{mgrl_block_forward.9} parent=31 // pred_check_branch
              %141 = sbr.rel (0) target = $region36
            $region35: #{mgrl_block_forward.9} parent=31 // pred_region
              loop: start=0, step=1, limit=1
              $region37: #{mgrl_block_forward.9} parent=35 // loop_pre_header
                _
              $region38: #{mgrl_block_forward.9} parent=35 // loop_header
                %s143 = sphi 0, %s147
                %p144 = scmp.ge.s32.totalorder %s143, 1
                %s148 = sphi %s137, %s137
                %s149 = sphi %s134, %s134
              $region39: #{mgrl_block_forward.9} parent=35 // loop_header_branch
                %146 = sbr.rel (%p144) target = $region43
              $region40: #{mgrl_block_forward.9} parent=35 // loop_body
                %v150 = vld [vmem:[%s148] sm:$0xff]
                %151 = vst [vmem:[%s149] sm:$0xff] %v150
                %v152 = vld [vmem:[%s148 + $0x8] sm:$0xff]
                %153 = vst [vmem:[%s149 + $0x8] sm:$0xff] %v152
                %v154 = vld [vmem:[%s148 + $0x10] sm:$0xff]
                %155 = vst [vmem:[%s149 + $0x10] sm:$0xff] %v154
                %v156 = vld [vmem:[%s148 + $0x18] sm:$0xff]
                %157 = vst [vmem:[%s149 + $0x18] sm:$0xff] %v156
                %v158 = vld [vmem:[%s148 + $0x20] sm:$0xff]
                %159 = vst [vmem:[%s149 + $0x20] sm:$0xff] %v158
                %v160 = vld [vmem:[%s148 + $0x28] sm:$0xff]
                %161 = vst [vmem:[%s149 + $0x28] sm:$0xff] %v160
                %v162 = vld [vmem:[%s148 + $0x30] sm:$0xff]
                %163 = vst [vmem:[%s149 + $0x30] sm:$0xff] %v162
                %v164 = vld [vmem:[%s148 + $0x38] sm:$0xff]
                %165 = vst [vmem:[%s149 + $0x38] sm:$0xff] %v164
                %v166 = vld [vmem:[%s148 + $0x740] sm:$0xff]
                %167 = vst [vmem:[%s149 + $0x40] sm:$0xff] %v166
                %v168 = vld [vmem:[%s148 + $0x748] sm:$0xff]
                %169 = vst [vmem:[%s149 + $0x48] sm:$0xff] %v168
                %v170 = vld [vmem:[%s148 + $0x750] sm:$0xff]
                %171 = vst [vmem:[%s149 + $0x50] sm:$0xff] %v170
                %v172 = vld [vmem:[%s148 + $0x758] sm:$0xff]
                %173 = vst [vmem:[%s149 + $0x58] sm:$0xff] %v172
                %v174 = vld [vmem:[%s148 + $0x760] sm:$0xff]
                %175 = vst [vmem:[%s149 + $0x60] sm:$0xff] %v174
                %v176 = vld [vmem:[%s148 + $0x768] sm:$0xff]
                %177 = vst [vmem:[%s149 + $0x68] sm:$0xff] %v176
                %v178 = vld [vmem:[%s148 + $0x770] sm:$0xff]
                %179 = vst [vmem:[%s149 + $0x70] sm:$0xff] %v178
                %v180 = vld [vmem:[%s148 + $0x778] sm:$0xff]
                %181 = vst [vmem:[%s149 + $0x78] sm:$0xff] %v180
                %v182 = vld [vmem:[%s148 + $0xe80] sm:$0xff]
                %183 = vst [vmem:[%s149 + $0x80] sm:$0xff] %v182
                %v184 = vld [vmem:[%s148 + $0xe88] sm:$0xff]
                %185 = vst [vmem:[%s149 + $0x88] sm:$0xff] %v184
                %v186 = vld [vmem:[%s148 + $0xe90] sm:$0xff]
                %187 = vst [vmem:[%s149 + $0x90] sm:$0xff] %v186
                %v188 = vld [vmem:[%s148 + $0xe98] sm:$0xff]
                %189 = vst [vmem:[%s149 + $0x98] sm:$0xff] %v188
                %v190 = vld [vmem:[%s148 + $0xea0] sm:$0xff]
                %191 = vst [vmem:[%s149 + $0xa0] sm:$0xff] %v190
                %v192 = vld [vmem:[%s148 + $0xea8] sm:$0xff]
                %193 = vst [vmem:[%s149 + $0xa8] sm:$0xff] %v192
                %v194 = vld [vmem:[%s148 + $0xeb0] sm:$0xff]
                %195 = vst [vmem:[%s149 + $0xb0] sm:$0xff] %v194
                %v196 = vld [vmem:[%s148 + $0xeb8] sm:$0xff]
                %197 = vst [vmem:[%s149 + $0xb8] sm:$0xff] %v196
                %v198 = vld [vmem:[%s148 + $0x15c0] sm:$0xff]
                %199 = vst [vmem:[%s149 + $0xc0] sm:$0xff] %v198
                %v200 = vld [vmem:[%s148 + $0x15c8] sm:$0xff]
                %201 = vst [vmem:[%s149 + $0xc8] sm:$0xff] %v200
                %v202 = vld [vmem:[%s148 + $0x15d0] sm:$0xff]
                %203 = vst [vmem:[%s149 + $0xd0] sm:$0xff] %v202
                %v204 = vld [vmem:[%s148 + $0x15d8] sm:$0xff]
                %205 = vst [vmem:[%s149 + $0xd8] sm:$0xff] %v204
                %v206 = vld [vmem:[%s148 + $0x15e0] sm:$0xff]
                %207 = vst [vmem:[%s149 + $0xe0] sm:$0xff] %v206
                %v208 = vld [vmem:[%s148 + $0x15e8] sm:$0xff]
                %209 = vst [vmem:[%s149 + $0xe8] sm:$0xff] %v208
                %v210 = vld [vmem:[%s148 + $0x15f0] sm:$0xff]
                %211 = vst [vmem:[%s149 + $0xf0] sm:$0xff] %v210
                %v212 = vld [vmem:[%s148 + $0x15f8] sm:$0xff]
                %213 = vst [vmem:[%s149 + $0xf8] sm:$0xff] %v212
                %v214 = vld [vmem:[%s148 + $0x1d00] sm:$0xff]
                %215 = vst [vmem:[%s149 + $0x100] sm:$0xff] %v214
                %v216 = vld [vmem:[%s148 + $0x1d08] sm:$0xff]
                %217 = vst [vmem:[%s149 + $0x108] sm:$0xff] %v216
                %v218 = vld [vmem:[%s148 + $0x1d10] sm:$0xff]
                %219 = vst [vmem:[%s149 + $0x110] sm:$0xff] %v218
                %v220 = vld [vmem:[%s148 + $0x1d18] sm:$0xff]
                %221 = vst [vmem:[%s149 + $0x118] sm:$0xff] %v220
                %v222 = vld [vmem:[%s148 + $0x1d20] sm:$0xff]
                %223 = vst [vmem:[%s149 + $0x120] sm:$0xff] %v222
                %v224 = vld [vmem:[%s148 + $0x1d28] sm:$0xff]
                %225 = vst [vmem:[%s149 + $0x128] sm:$0xff] %v224
                %v226 = vld [vmem:[%s148 + $0x1d30] sm:$0xff]
                %227 = vst [vmem:[%s149 + $0x130] sm:$0xff] %v226
                %v228 = vld [vmem:[%s148 + $0x1d38] sm:$0xff]
                %229 = vst [vmem:[%s149 + $0x138] sm:$0xff] %v228
              $region41: #{mgrl_block_forward.9} parent=35 // loop_footer
                %s147 = sadd.s32 1, %s143
              $region42: #{mgrl_block_forward.9} parent=35 // loop_footer_branch
                %142 = sbr.rel target = $region38
              $region43: #{mgrl_block_forward.9} parent=35 // loop_exit
                _
            $region36: #{mgrl_block_forward.9} parent=31 // pred_fallthru
              _
            // Predicated region
            $region44: #{mgrl_block_forward.9} parent=31 // pred_check
              _
            $region45: #{mgrl_block_forward.9} parent=31 // pred_check_branch
              %231 = sbr.rel target = $region47
            $region46: #{mgrl_block_forward.9} parent=31 // pred_region
              _
            $region47: #{mgrl_block_forward.9} parent=31 // pred_fallthru
              _
          $region32: #{mgrl_block_forward.9} parent=27 // pred_fallthru
            _
          %232 = vnop
        $region28: #{mgrl_block_forward.9} parent=23 // pred_fallthru
          _
      $region24: #{mgrl_block_forward.9} parent=5 // pred_fallthru
        _
      %p233 = scmp.le.s32.totalorder 1, %s9
      %p234 = scmp.lt.s32.totalorder %s9, 30
      %p235 = pnand %p233, %p234
      %p236 = pneg %p235
      // Predicated region
      $region48: #{mgrl_block_forward.9} parent=5 // pred_check
        _
      $region49: #{mgrl_block_forward.9} parent=5 // pred_check_branch
        %238 = sbr.rel (%p235) target = $region51
      $region50: #{mgrl_block_forward.9} parent=5 // pred_region
        %s239 = ssub.s32 %s9, 1
        %s240 = sand.u32 %s43, 1
        %s241 = sand.u32 %s43, 1
        %s242 = smul.addr %s241, 320
        %s243 = scalar_lea.vmem [#allocation2], %s242
        // Predicated region
        $region52: #{mgrl_block_forward.9} parent=50 // pred_check
          %p244 = pneg %p56
        $region53: #{mgrl_block_forward.9} parent=50 // pred_check_branch
          %246 = sbr.rel (%p244) target = $region55
        $region54: #{mgrl_block_forward.9} parent=50 // pred_region
          _
        $region55: #{mgrl_block_forward.9} parent=50 // pred_fallthru
          _
        %p247 = pneg %p30
        %p248 = pneg %p27
        %s249 = sand.u32 %s43, 1
        %s250 = sand.u32 %s43, 1
        %s251 = smul.addr %s250, 320
        %s252 = scalar_lea.vmem [#allocation2], %s251
        %p253 = pneg %p56
        %p254 = pneg %p53
        %p255 = pneg %p77
        %p256 = pneg %p74
        %p257 = pneg %p103
        %p258 = pneg %p100
        %s259 = smul.u32 8, %s14
        %p260 = scmp.lt.s32.totalorder %s259, 231
        %s261 = scalar_select %p260, %s259, 231
        %s262 = smul.addr %s261, 4
        %s263 = scalar_lea.vmem %s3, %s262
        %s264 = smul.u32 8, %s14
        %s265 = smul.u32 8, %s14
        %p266 = scmp.lt.s32.totalorder %s265, 231
        %s267 = scalar_select %p266, %s265, 231
        %s268 = smul.addr %s267, 4
        %s269 = scalar_lea.vmem %s3, %s268
        %s270 = smul.u32 8, %s14
        %v271 = vld [vmem:[%s0] sm:$0xf]
        %v272 = vld [vmem:[%s243] sm:$0xff]
        %v273 = vld [vmem:[%s243 + $0x8] sm:$0xff]
        %v274 = vld [vmem:[%s243 + $0x10] sm:$0xff]
        %v275 = vld [vmem:[%s243 + $0x18] sm:$0xff]
        %v276 = vld [vmem:[%s243 + $0x20] sm:$0xff]
        %v277 = vld [vmem:[%s243 + $0x28] sm:$0xff]
        %v278 = vld [vmem:[%s243 + $0x30] sm:$0xff]
        %v279 = vld [vmem:[%s243 + $0x38] sm:$0xff]
        %v280 = vld [vmem:[%s243 + $0x40] sm:$0xff]
        %v281 = vld [vmem:[%s243 + $0x48] sm:$0xff]
        %v282 = vld [vmem:[%s243 + $0x50] sm:$0xff]
        %v283 = vld [vmem:[%s243 + $0x58] sm:$0xff]
        %v284 = vld [vmem:[%s243 + $0x60] sm:$0xff]
        %v285 = vld [vmem:[%s243 + $0x68] sm:$0xff]
        %v286 = vld [vmem:[%s243 + $0x70] sm:$0xff]
        %v287 = vld [vmem:[%s243 + $0x78] sm:$0xff]
        %v288 = vld [vmem:[%s243 + $0x80] sm:$0xff]
        %v289 = vld [vmem:[%s243 + $0x88] sm:$0xff]
        %v290 = vld [vmem:[%s243 + $0x90] sm:$0xff]
        %v291 = vld [vmem:[%s243 + $0x98] sm:$0xff]
        %v292 = vld [vmem:[%s243 + $0xa0] sm:$0xff]
        %v293 = vld [vmem:[%s243 + $0xa8] sm:$0xff]
        %v294 = vld [vmem:[%s243 + $0xb0] sm:$0xff]
        %v295 = vld [vmem:[%s243 + $0xb8] sm:$0xff]
        %v296 = vld [vmem:[%s243 + $0xc0] sm:$0xff]
        %v297 = vld [vmem:[%s243 + $0xc8] sm:$0xff]
        %v298 = vld [vmem:[%s243 + $0xd0] sm:$0xff]
        %v299 = vld [vmem:[%s243 + $0xd8] sm:$0xff]
        %v300 = vld [vmem:[%s243 + $0xe0] sm:$0xff]
        %v301 = vld [vmem:[%s243 + $0xe8] sm:$0xff]
        %v302 = vld [vmem:[%s243 + $0xf0] sm:$0xff]
        %v303 = vld [vmem:[%s243 + $0xf8] sm:$0xff]
        %v304 = vld [vmem:[%s243 + $0x100] sm:$0xf]
        %v305 = vld [vmem:[%s243 + $0x108] sm:$0xf]
        %v306 = vld [vmem:[%s243 + $0x110] sm:$0xf]
        %v307 = vld [vmem:[%s243 + $0x118] sm:$0xf]
        %v308 = vld [vmem:[%s243 + $0x120] sm:$0xf]
        %v309 = vld [vmem:[%s243 + $0x128] sm:$0xf]
        %v310 = vld [vmem:[%s243 + $0x130] sm:$0xf]
        %v311 = vld [vmem:[%s243 + $0x138] sm:$0xf]
        %v312 = vld [vmem:[%s2] sm:$0xf]
        %314 = vset.pattern.permute.xlu0 0
        %315 = vperm.xlu0 %314, %v312
        %v316 = vpop.permute.xlu0 %315
        %vm318 = vcmask 293888
        %v320 = vsel %vm318, %v271, 0
        %vm322 = vcmask 1043456
        %v324 = vsel %vm322, %v304, 0
        %v327 = vsel %vm322, %v305, 0
        %v330 = vsel %vm322, %v306, 0
        %v333 = vsel %vm322, %v307, 0
        %v336 = vsel %vm322, %v308, 0
        %v339 = vsel %vm322, %v309, 0
        %v342 = vsel %vm322, %v310, 0
        %v345 = vsel %vm322, %v311, 0
        %347 = vmatprep.subr.mxu0 0.0
        %348 = vmatpush1.msra.mxu0 0.0
        %349 = vmatprep.subr.mxu0 0.0
        %350 = vmatpush1.msra.mxu0 0.0
        %351 = vmatprep.subr.mxu0 0.0
        %352 = vmatpush1.msra.mxu0 0.0
        %353 = vmatprep.subr.mxu0 0.0
        %354 = vmatpush1.msra.mxu0 0.0
        %355 = vmatprep.subr.mxu0 0.0
        %356 = vmatpush1.msra.mxu0 0.0
        %357 = vmatprep.subr.mxu0 0.0
        %358 = vmatpush1.msra.mxu0 0.0
        %359 = vmatprep.subr.mxu0 0.0
        %360 = vmatpush1.msra.mxu0 0.0
        %361 = vmatprep.subr.mxu0 0.0
        %362 = vmatpush1.msra.mxu0 0.0
        %363 = vmatprep.subr.mxu0 0.0
        %364 = vmatpush1.msra.mxu0 0.0
        %365 = vmatprep.subr.mxu0 0.0
        %366 = vmatpush1.msra.mxu0 0.0
        %367 = vmatprep.subr.mxu0 0.0
        %368 = vmatpush1.msra.mxu0 0.0
        %369 = vmatprep.subr.mxu0 %v327
        %370 = vmatpush1.msra.mxu0 %v324
        %371 = vmatprep.subr.mxu0 %v297
        %372 = vmatpush1.msra.mxu0 %v296
        %373 = vmatprep.subr.mxu0 %v289
        %374 = vmatpush1.msra.mxu0 %v288
        %375 = vmatprep.subr.mxu0 %v281
        %376 = vmatpush1.msra.mxu0 %v280
        %377 = vmatprep.subr.mxu0 %v273
        %378 = vmatpush1.msra.mxu0 %v272
        %379 = vmatprep.subr.mxu0 0.0
        %380 = vmatpush2.msra.mxu0 0.0
        %381 = vmatprep.subr.mxu0 0.0
        %382 = vmatpush2.msra.mxu0 0.0
        %383 = vmatprep.subr.mxu0 0.0
        %384 = vmatpush2.msra.mxu0 0.0
        %385 = vmatprep.subr.mxu0 0.0
        %386 = vmatpush2.msra.mxu0 0.0
        %387 = vmatprep.subr.mxu0 0.0
        %388 = vmatpush2.msra.mxu0 0.0
        %389 = vmatprep.subr.mxu0 0.0
        %390 = vmatpush2.msra.mxu0 0.0
        %391 = vmatprep.subr.mxu0 0.0
        %392 = vmatpush2.msra.mxu0 0.0
        %393 = vmatprep.subr.mxu0 0.0
        %394 = vmatpush2.msra.mxu0 0.0
        %395 = vmatprep.subr.mxu0 0.0
        %396 = vmatpush2.msra.mxu0 0.0
        %397 = vmatprep.subr.mxu0 0.0
        %398 = vmatpush2.msra.mxu0 0.0
        %399 = vmatprep.subr.mxu0 0.0
        %400 = vmatpush2.msra.mxu0 0.0
        %401 = vmatprep.subr.mxu0 0.0
        %402 = vmatpush2.msra.mxu0 0.0
        %403 = vmatprep.subr.mxu0 0.0
        %404 = vmatpush2.msra.mxu0 0.0
        %405 = vmatprep.subr.mxu0 0.0
        %406 = vmatpush2.msra.mxu0 0.0
        %407 = vmatprep.subr.mxu0 0.0
        %408 = vmatpush2.msra.mxu0 0.0
        %409 = vmatprep.subr.mxu0 0.0
        %410 = vmatpush2.msra.mxu0 0.0
        %411 = vmatprep.mubr.f32.mxu0 0.0
        %412 = vmatmul.mubr.f32.gmra.mxu0 %v320
        %v413 = vpop.f32.mrf.mxu0
        %v414 = vadd.f32 %v316, %v413
        %v415 = vpop.f32.mrf.mxu0
        %v416 = vadd.f32 %v316, %v415
        %417 = vdwg.mxu0
        %418 = vmatprep.subr.mxu0 0.0
        %419 = vmatpush1.msra.mxu0 0.0
        %420 = vmatprep.subr.mxu0 0.0
        %421 = vmatpush1.msra.mxu0 0.0
        %422 = vmatprep.subr.mxu0 0.0
        %423 = vmatpush1.msra.mxu0 0.0
        %424 = vmatprep.subr.mxu0 0.0
        %425 = vmatpush1.msra.mxu0 0.0
        %426 = vmatprep.subr.mxu0 0.0
        %427 = vmatpush1.msra.mxu0 0.0
        %428 = vmatprep.subr.mxu0 0.0
        %429 = vmatpush1.msra.mxu0 0.0
        %430 = vmatprep.subr.mxu0 0.0
        %431 = vmatpush1.msra.mxu0 0.0
        %432 = vmatprep.subr.mxu0 0.0
        %433 = vmatpush1.msra.mxu0 0.0
        %434 = vmatprep.subr.mxu0 0.0
        %435 = vmatpush1.msra.mxu0 0.0
        %436 = vmatprep.subr.mxu0 0.0
        %437 = vmatpush1.msra.mxu0 0.0
        %438 = vmatprep.subr.mxu0 0.0
        %439 = vmatpush1.msra.mxu0 0.0
        %440 = vmatprep.subr.mxu0 %v333
        %441 = vmatpush1.msra.mxu0 %v330
        %442 = vmatprep.subr.mxu0 %v299
        %443 = vmatpush1.msra.mxu0 %v298
        %444 = vmatprep.subr.mxu0 %v291
        %445 = vmatpush1.msra.mxu0 %v290
        %446 = vmatprep.subr.mxu0 %v283
        %447 = vmatpush1.msra.mxu0 %v282
        %448 = vmatprep.subr.mxu0 %v275
        %449 = vmatpush1.msra.mxu0 %v274
        %450 = vmatprep.subr.mxu0 0.0
        %451 = vmatpush2.msra.mxu0 0.0
        %452 = vmatprep.subr.mxu0 0.0
        %453 = vmatpush2.msra.mxu0 0.0
        %454 = vmatprep.subr.mxu0 0.0
        %455 = vmatpush2.msra.mxu0 0.0
        %456 = vmatprep.subr.mxu0 0.0
        %457 = vmatpush2.msra.mxu0 0.0
        %458 = vmatprep.subr.mxu0 0.0
        %459 = vmatpush2.msra.mxu0 0.0
        %460 = vmatprep.subr.mxu0 0.0
        %461 = vmatpush2.msra.mxu0 0.0
        %462 = vmatprep.subr.mxu0 0.0
        %463 = vmatpush2.msra.mxu0 0.0
        %464 = vmatprep.subr.mxu0 0.0
        %465 = vmatpush2.msra.mxu0 0.0
        %466 = vmatprep.subr.mxu0 0.0
        %467 = vmatpush2.msra.mxu0 0.0
        %468 = vmatprep.subr.mxu0 0.0
        %469 = vmatpush2.msra.mxu0 0.0
        %470 = vmatprep.subr.mxu0 0.0
        %471 = vmatpush2.msra.mxu0 0.0
        %472 = vmatprep.subr.mxu0 0.0
        %473 = vmatpush2.msra.mxu0 0.0
        %474 = vmatprep.subr.mxu0 0.0
        %475 = vmatpush2.msra.mxu0 0.0
        %476 = vmatprep.subr.mxu0 0.0
        %477 = vmatpush2.msra.mxu0 0.0
        %478 = vmatprep.subr.mxu0 0.0
        %479 = vmatpush2.msra.mxu0 0.0
        %480 = vmatprep.subr.mxu0 0.0
        %481 = vmatpush2.msra.mxu0 0.0
        %482 = vmatprep.mubr.f32.mxu0 0.0
        %483 = vmatmul.mubr.f32.gmra.mxu0 %v320
        %v484 = vpop.f32.mrf.mxu0
        %v485 = vadd.f32 %v316, %v484
        %v486 = vpop.f32.mrf.mxu0
        %v487 = vadd.f32 %v316, %v486
        %488 = vdwg.mxu0
        %489 = vmatprep.subr.mxu0 0.0
        %490 = vmatpush1.msra.mxu0 0.0
        %491 = vmatprep.subr.mxu0 0.0
        %492 = vmatpush1.msra.mxu0 0.0
        %493 = vmatprep.subr.mxu0 0.0
        %494 = vmatpush1.msra.mxu0 0.0
        %495 = vmatprep.subr.mxu0 0.0
        %496 = vmatpush1.msra.mxu0 0.0
        %497 = vmatprep.subr.mxu0 0.0
        %498 = vmatpush1.msra.mxu0 0.0
        %499 = vmatprep.subr.mxu0 0.0
        %500 = vmatpush1.msra.mxu0 0.0
        %501 = vmatprep.subr.mxu0 0.0
        %502 = vmatpush1.msra.mxu0 0.0
        %503 = vmatprep.subr.mxu0 0.0
        %504 = vmatpush1.msra.mxu0 0.0
        %505 = vmatprep.subr.mxu0 0.0
        %506 = vmatpush1.msra.mxu0 0.0
        %507 = vmatprep.subr.mxu0 0.0
        %508 = vmatpush1.msra.mxu0 0.0
        %509 = vmatprep.subr.mxu0 0.0
        %510 = vmatpush1.msra.mxu0 0.0
        %511 = vmatprep.subr.mxu0 %v339
        %512 = vmatpush1.msra.mxu0 %v336
        %513 = vmatprep.subr.mxu0 %v301
        %514 = vmatpush1.msra.mxu0 %v300
        %515 = vmatprep.subr.mxu0 %v293
        %516 = vmatpush1.msra.mxu0 %v292
        %517 = vmatprep.subr.mxu0 %v285
        %518 = vmatpush1.msra.mxu0 %v284
        %519 = vmatprep.subr.mxu0 %v277
        %520 = vmatpush1.msra.mxu0 %v276
        %521 = vmatprep.subr.mxu0 0.0
        %522 = vmatpush2.msra.mxu0 0.0
        %523 = vmatprep.subr.mxu0 0.0
        %524 = vmatpush2.msra.mxu0 0.0
        %525 = vmatprep.subr.mxu0 0.0
        %526 = vmatpush2.msra.mxu0 0.0
        %527 = vmatprep.subr.mxu0 0.0
        %528 = vmatpush2.msra.mxu0 0.0
        %529 = vmatprep.subr.mxu0 0.0
        %530 = vmatpush2.msra.mxu0 0.0
        %531 = vmatprep.subr.mxu0 0.0
        %532 = vmatpush2.msra.mxu0 0.0
        %533 = vmatprep.subr.mxu0 0.0
        %534 = vmatpush2.msra.mxu0 0.0
        %535 = vmatprep.subr.mxu0 0.0
        %536 = vmatpush2.msra.mxu0 0.0
        %537 = vmatprep.subr.mxu0 0.0
        %538 = vmatpush2.msra.mxu0 0.0
        %539 = vmatprep.subr.mxu0 0.0
        %540 = vmatpush2.msra.mxu0 0.0
        %541 = vmatprep.subr.mxu0 0.0
        %542 = vmatpush2.msra.mxu0 0.0
        %543 = vmatprep.subr.mxu0 0.0
        %544 = vmatpush2.msra.mxu0 0.0
        %545 = vmatprep.subr.mxu0 0.0
        %546 = vmatpush2.msra.mxu0 0.0
        %547 = vmatprep.subr.mxu0 0.0
        %548 = vmatpush2.msra.mxu0 0.0
        %549 = vmatprep.subr.mxu0 0.0
        %550 = vmatpush2.msra.mxu0 0.0
        %551 = vmatprep.subr.mxu0 0.0
        %552 = vmatpush2.msra.mxu0 0.0
        %553 = vmatprep.mubr.f32.mxu0 0.0
        %554 = vmatmul.mubr.f32.gmra.mxu0 %v320
        %v555 = vpop.f32.mrf.mxu0
        %v556 = vadd.f32 %v316, %v555
        %v557 = vpop.f32.mrf.mxu0
        %v558 = vadd.f32 %v316, %v557
        %559 = vdwg.mxu0
        %560 = vmatprep.subr.mxu0 0.0
        %561 = vmatpush1.msra.mxu0 0.0
        %562 = vmatprep.subr.mxu0 0.0
        %563 = vmatpush1.msra.mxu0 0.0
        %564 = vmatprep.subr.mxu0 0.0
        %565 = vmatpush1.msra.mxu0 0.0
        %566 = vmatprep.subr.mxu0 0.0
        %567 = vmatpush1.msra.mxu0 0.0
        %568 = vmatprep.subr.mxu0 0.0
        %569 = vmatpush1.msra.mxu0 0.0
        %570 = vmatprep.subr.mxu0 0.0
        %571 = vmatpush1.msra.mxu0 0.0
        %572 = vmatprep.subr.mxu0 0.0
        %573 = vmatpush1.msra.mxu0 0.0
        %574 = vmatprep.subr.mxu0 0.0
        %575 = vmatpush1.msra.mxu0 0.0
        %576 = vmatprep.subr.mxu0 0.0
        %577 = vmatpush1.msra.mxu0 0.0
        %578 = vmatprep.subr.mxu0 0.0
        %579 = vmatpush1.msra.mxu0 0.0
        %580 = vmatprep.subr.mxu0 0.0
        %581 = vmatpush1.msra.mxu0 0.0
        %582 = vmatprep.subr.mxu0 %v345
        %583 = vmatpush1.msra.mxu0 %v342
        %584 = vmatprep.subr.mxu0 %v303
        %585 = vmatpush1.msra.mxu0 %v302
        %586 = vmatprep.subr.mxu0 %v295
        %587 = vmatpush1.msra.mxu0 %v294
        %588 = vmatprep.subr.mxu0 %v287
        %589 = vmatpush1.msra.mxu0 %v286
        %590 = vmatprep.subr.mxu0 %v279
        %591 = vmatpush1.msra.mxu0 %v278
        %592 = vmatprep.subr.mxu0 0.0
        %593 = vmatpush2.msra.mxu0 0.0
        %594 = vmatprep.subr.mxu0 0.0
        %595 = vmatpush2.msra.mxu0 0.0
        %596 = vmatprep.subr.mxu0 0.0
        %597 = vmatpush2.msra.mxu0 0.0
        %598 = vmatprep.subr.mxu0 0.0
        %599 = vmatpush2.msra.mxu0 0.0
        %600 = vmatprep.subr.mxu0 0.0
        %601 = vmatpush2.msra.mxu0 0.0
        %602 = vmatprep.subr.mxu0 0.0
        %603 = vmatpush2.msra.mxu0 0.0
        %604 = vmatprep.subr.mxu0 0.0
        %605 = vmatpush2.msra.mxu0 0.0
        %606 = vmatprep.subr.mxu0 0.0
        %607 = vmatpush2.msra.mxu0 0.0
        %608 = vmatprep.subr.mxu0 0.0
        %609 = vmatpush2.msra.mxu0 0.0
        %610 = vmatprep.subr.mxu0 0.0
        %611 = vmatpush2.msra.mxu0 0.0
        %612 = vmatprep.subr.mxu0 0.0
        %613 = vmatpush2.msra.mxu0 0.0
        %614 = vmatprep.subr.mxu0 0.0
        %615 = vmatpush2.msra.mxu0 0.0
        %616 = vmatprep.subr.mxu0 0.0
        %617 = vmatpush2.msra.mxu0 0.0
        %618 = vmatprep.subr.mxu0 0.0
        %619 = vmatpush2.msra.mxu0 0.0
        %620 = vmatprep.subr.mxu0 0.0
        %621 = vmatpush2.msra.mxu0 0.0
        %622 = vmatprep.subr.mxu0 0.0
        %623 = vmatpush2.msra.mxu0 0.0
        %624 = vmatprep.mubr.f32.mxu0 0.0
        %625 = vmatmul.mubr.f32.gmra.mxu0 %v320
        %v626 = vpop.f32.mrf.mxu0
        %v627 = vadd.f32 %v316, %v626
        %v628 = vpop.f32.mrf.mxu0
        %v629 = vadd.f32 %v316, %v628
        %630 = vdwg.mxu0
        %v639 = vcombine.low %v414, %v416
        %v640 = vcombine.low %v485, %v487
        %v641 = vcombine.low %v556, %v558
        %v642 = vcombine.low %v627, %v629
        %647 = vst [vmem:[%s269] sm:$0xff] %v639
        %648 = vst [vmem:[%s269 + $0x8] sm:$0xff] %v640
        %649 = vst [vmem:[%s269 + $0x10] sm:$0xff] %v641
        %650 = vst [vmem:[%s269 + $0x18] sm:$0xff] %v642
        %s651 = smul.u32 8, %s14
        %p652 = scmp.lt.s32.totalorder %s651, 231
        %s653 = scalar_select %p652, %s651, 231
        %s654 = smul.addr %s653, 4
        %s655 = scalar_lea.vmem %s3, %s654
        // Predicated region
        $region56: #{mgrl_block_forward.9} parent=50 // pred_check
          %p656 = pneg %p100
        $region57: #{mgrl_block_forward.9} parent=50 // pred_check_branch
          %658 = sbr.rel (%p656) target = $region59
        $region58: #{mgrl_block_forward.9} parent=50 // pred_region
          %s659 = smul.u32 8, %s14
        $region59: #{mgrl_block_forward.9} parent=50 // pred_fallthru
          _
      $region51: #{mgrl_block_forward.9} parent=5 // pred_fallthru
        _
      %p660 = scmp.le.s32.totalorder 2, %s9
      // Predicated region
      $region60: #{mgrl_block_forward.9} parent=5 // pred_check
        %p661 = pneg %p660
      $region61: #{mgrl_block_forward.9} parent=5 // pred_check_branch
        %663 = sbr.rel (%p661) target = $region63
      $region62: #{mgrl_block_forward.9} parent=5 // pred_region
        %s664 = ssub.s32 %s9, 2
        // Predicated region
        $region64: #{mgrl_block_forward.9} parent=62 // pred_check
          %p665 = pneg %p106
        $region65: #{mgrl_block_forward.9} parent=62 // pred_check_branch
          %667 = sbr.rel (%p665) target = $region67
        $region66: #{mgrl_block_forward.9} parent=62 // pred_region
          %s668 = smul.u32 8, %s15
          %p669 = scmp.lt.s32.totalorder %s668, 231
          %s670 = scalar_select %p669, %s668, 231
          %s671 = smul.addr %s670, 4
          %s672 = scalar_lea.vmem %s3, %s671
        $region67: #{mgrl_block_forward.9} parent=62 // pred_fallthru
          _
      $region63: #{mgrl_block_forward.9} parent=5 // pred_fallthru
        _
    $region6: #{mgrl_block_forward.9} parent=1 // loop_footer
      %s13 = sadd.s32 1, %s9
    $region7: #{mgrl_block_forward.9} parent=1 // loop_footer_branch
      %8 = sbr.rel target = $region3
    $region8: #{mgrl_block_forward.9} parent=1 // loop_exit
      _

// kernel: mgrl_block_forward.12
$region0: #{mgrl_block_forward.12}
  #allocation0 [shape = 'u32[]', space=smem, size = 0x4, offset = 0x4, fixed_abs, tag = 'smem constant byte address 0x4 - core index']
  #allocation1 [shape = 'u32[144,128]{1,0:T(1,128)}', space=vmem, size = 0x12000, scoped, tag = 'internal scratch']
  %s0 = inlined_call_operand.vmem [shape: f32[4,36], index: 0, kind: input, shape index: {}]
  %s1 = inlined_call_operand.vmem [shape: f32[36,512], index: 1, kind: input, shape index: {}]
  %s2 = inlined_call_operand.vmem [shape: f32[4,1], index: 2, kind: input, shape index: {}]
  %s3 = inlined_call_operand.vmem [shape: f32[4,512], index: 3, kind: output, shape index: {}]
  %s4 = sld [smem:[#allocation0]]
  $region22: #{mgrl_block_forward.12} parent=0
    _
  %s6 = ssub.s32 1, %s4
  %s7 = scalar_select 0, %s6, %s4
  // Predicated region
  $region2: #{mgrl_block_forward.12} parent=0 // pred_check
    _
  $region3: #{mgrl_block_forward.12} parent=0 // pred_check_branch
    %9 = sbr.rel (0) target = $region5
  $region4: #{mgrl_block_forward.12} parent=0 // pred_region
    _
  $region5: #{mgrl_block_forward.12} parent=0 // pred_fallthru
    _
  // Predicated region
  $region6: #{mgrl_block_forward.12} parent=0 // pred_check
    _
  $region7: #{mgrl_block_forward.12} parent=0 // pred_check_branch
    %11 = sbr.rel (0) target = $region9
  $region8: #{mgrl_block_forward.12} parent=0 // pred_region
    _
  $region9: #{mgrl_block_forward.12} parent=0 // pred_fallthru
    _
  // Predicated region
  $region10: #{mgrl_block_forward.12} parent=0 // pred_check
    _
  $region11: #{mgrl_block_forward.12} parent=0 // pred_check_branch
    %13 = sbr.rel (0) target = $region13
  $region12: #{mgrl_block_forward.12} parent=0 // pred_region
    _
  $region13: #{mgrl_block_forward.12} parent=0 // pred_fallthru
    _
  %v14 = vld [vmem:[%s0] sm:$0xf]
  %v15 = vld [vmem:[%s1] sm:$0xff]
  %v16 = vld [vmem:[%s1 + $0x8] sm:$0xff]
  %v17 = vld [vmem:[%s1 + $0x10] sm:$0xff]
  %v18 = vld [vmem:[%s1 + $0x18] sm:$0xff]
  %v19 = vld [vmem:[%s1 + $0x20] sm:$0xff]
  %v20 = vld [vmem:[%s1 + $0x28] sm:$0xff]
  %v21 = vld [vmem:[%s1 + $0x30] sm:$0xff]
  %v22 = vld [vmem:[%s1 + $0x38] sm:$0xff]
  %v23 = vld [vmem:[%s1 + $0x40] sm:$0xff]
  %v24 = vld [vmem:[%s1 + $0x48] sm:$0xff]
  %v25 = vld [vmem:[%s1 + $0x50] sm:$0xff]
  %v26 = vld [vmem:[%s1 + $0x58] sm:$0xff]
  %v27 = vld [vmem:[%s1 + $0x60] sm:$0xff]
  %v28 = vld [vmem:[%s1 + $0x68] sm:$0xff]
  %v29 = vld [vmem:[%s1 + $0x70] sm:$0xff]
  %v30 = vld [vmem:[%s1 + $0x78] sm:$0xff]
  %v31 = vld [vmem:[%s1 + $0x80] sm:$0xf]
  %v32 = vld [vmem:[%s1 + $0x88] sm:$0xf]
  %v33 = vld [vmem:[%s1 + $0x90] sm:$0xf]
  %v34 = vld [vmem:[%s1 + $0x98] sm:$0xf]
  %v35 = vld [vmem:[%s2] sm:$0xf]
  %37 = vset.pattern.permute.xlu0 0
  %38 = vperm.xlu0 %37, %v35
  %v39 = vpop.permute.xlu0 %38
  %vm41 = vcmask 293888
  %v43 = vsel %vm41, %v14, 0
  %vm45 = vcmask 1043456
  %v47 = vsel %vm45, %v31, 0
  %v50 = vsel %vm45, %v32, 0
  %v53 = vsel %vm45, %v33, 0
  %v56 = vsel %vm45, %v34, 0
  %58 = vmatprep.subr.mxu0 0.0
  %59 = vmatpush1.msra.mxu0 0.0
  %60 = vmatprep.subr.mxu0 0.0
  %61 = vmatpush1.msra.mxu0 0.0
  %62 = vmatprep.subr.mxu0 0.0
  %63 = vmatpush1.msra.mxu0 0.0
  %64 = vmatprep.subr.mxu0 0.0
  %65 = vmatpush1.msra.mxu0 0.0
  %66 = vmatprep.subr.mxu0 0.0
  %67 = vmatpush1.msra.mxu0 0.0
  %68 = vmatprep.subr.mxu0 0.0
  %69 = vmatpush1.msra.mxu0 0.0
  %70 = vmatprep.subr.mxu0 0.0
  %71 = vmatpush1.msra.mxu0 0.0
  %72 = vmatprep.subr.mxu0 0.0
  %73 = vmatpush1.msra.mxu0 0.0
  %74 = vmatprep.subr.mxu0 0.0
  %75 = vmatpush1.msra.mxu0 0.0
  %76 = vmatprep.subr.mxu0 0.0
  %77 = vmatpush1.msra.mxu0 0.0
  %78 = vmatprep.subr.mxu0 0.0
  %79 = vmatpush1.msra.mxu0 0.0
  %80 = vmatprep.subr.mxu0 %v50
  %81 = vmatpush1.msra.mxu0 %v47
  %82 = vmatprep.subr.mxu0 %v28
  %83 = vmatpush1.msra.mxu0 %v27
  %84 = vmatprep.subr.mxu0 %v24
  %85 = vmatpush1.msra.mxu0 %v23
  %86 = vmatprep.subr.mxu0 %v20
  %87 = vmatpush1.msra.mxu0 %v19
  %88 = vmatprep.subr.mxu0 %v16
  %89 = vmatpush1.msra.mxu0 %v15
  %90 = vmatprep.subr.mxu0 0.0
  %91 = vmatpush2.msra.mxu0 0.0
  %92 = vmatprep.subr.mxu0 0.0
  %93 = vmatpush2.msra.mxu0 0.0
  %94 = vmatprep.subr.mxu0 0.0
  %95 = vmatpush2.msra.mxu0 0.0
  %96 = vmatprep.subr.mxu0 0.0
  %97 = vmatpush2.msra.mxu0 0.0
  %98 = vmatprep.subr.mxu0 0.0
  %99 = vmatpush2.msra.mxu0 0.0
  %100 = vmatprep.subr.mxu0 0.0
  %101 = vmatpush2.msra.mxu0 0.0
  %102 = vmatprep.subr.mxu0 0.0
  %103 = vmatpush2.msra.mxu0 0.0
  %104 = vmatprep.subr.mxu0 0.0
  %105 = vmatpush2.msra.mxu0 0.0
  %106 = vmatprep.subr.mxu0 0.0
  %107 = vmatpush2.msra.mxu0 0.0
  %108 = vmatprep.subr.mxu0 0.0
  %109 = vmatpush2.msra.mxu0 0.0
  %110 = vmatprep.subr.mxu0 0.0
  %111 = vmatpush2.msra.mxu0 0.0
  %112 = vmatprep.subr.mxu0 0.0
  %113 = vmatpush2.msra.mxu0 0.0
  %114 = vmatprep.subr.mxu0 0.0
  %115 = vmatpush2.msra.mxu0 0.0
  %116 = vmatprep.subr.mxu0 0.0
  %117 = vmatpush2.msra.mxu0 0.0
  %118 = vmatprep.subr.mxu0 0.0
  %119 = vmatpush2.msra.mxu0 0.0
  %120 = vmatprep.subr.mxu0 0.0
  %121 = vmatpush2.msra.mxu0 0.0
  %122 = vmatprep.mubr.f32.mxu0 0.0
  %123 = vmatmul.mubr.f32.gmra.mxu0 %v43
  %v124 = vpop.f32.mrf.mxu0
  %v125 = vadd.f32 %v39, %v124
  %v126 = vpop.f32.mrf.mxu0
  %v127 = vadd.f32 %v39, %v126
  %128 = vdwg.mxu0
  %129 = vmatprep.subr.mxu0 0.0
  %130 = vmatpush1.msra.mxu0 0.0
  %131 = vmatprep.subr.mxu0 0.0
  %132 = vmatpush1.msra.mxu0 0.0
  %133 = vmatprep.subr.mxu0 0.0
  %134 = vmatpush1.msra.mxu0 0.0
  %135 = vmatprep.subr.mxu0 0.0
  %136 = vmatpush1.msra.mxu0 0.0
  %137 = vmatprep.subr.mxu0 0.0
  %138 = vmatpush1.msra.mxu0 0.0
  %139 = vmatprep.subr.mxu0 0.0
  %140 = vmatpush1.msra.mxu0 0.0
  %141 = vmatprep.subr.mxu0 0.0
  %142 = vmatpush1.msra.mxu0 0.0
  %143 = vmatprep.subr.mxu0 0.0
  %144 = vmatpush1.msra.mxu0 0.0
  %145 = vmatprep.subr.mxu0 0.0
  %146 = vmatpush1.msra.mxu0 0.0
  %147 = vmatprep.subr.mxu0 0.0
  %148 = vmatpush1.msra.mxu0 0.0
  %149 = vmatprep.subr.mxu0 0.0
  %150 = vmatpush1.msra.mxu0 0.0
  %151 = vmatprep.subr.mxu0 %v56
  %152 = vmatpush1.msra.mxu0 %v53
  %153 = vmatprep.subr.mxu0 %v30
  %154 = vmatpush1.msra.mxu0 %v29
  %155 = vmatprep.subr.mxu0 %v26
  %156 = vmatpush1.msra.mxu0 %v25
  %157 = vmatprep.subr.mxu0 %v22
  %158 = vmatpush1.msra.mxu0 %v21
  %159 = vmatprep.subr.mxu0 %v18
  %160 = vmatpush1.msra.mxu0 %v17
  %161 = vmatprep.subr.mxu0 0.0
  %162 = vmatpush2.msra.mxu0 0.0
  %163 = vmatprep.subr.mxu0 0.0
  %164 = vmatpush2.msra.mxu0 0.0
  %165 = vmatprep.subr.mxu0 0.0
  %166 = vmatpush2.msra.mxu0 0.0
  %167 = vmatprep.subr.mxu0 0.0
  %168 = vmatpush2.msra.mxu0 0.0
  %169 = vmatprep.subr.mxu0 0.0
  %170 = vmatpush2.msra.mxu0 0.0
  %171 = vmatprep.subr.mxu0 0.0
  %172 = vmatpush2.msra.mxu0 0.0
  %173 = vmatprep.subr.mxu0 0.0
  %174 = vmatpush2.msra.mxu0 0.0
  %175 = vmatprep.subr.mxu0 0.0
  %176 = vmatpush2.msra.mxu0 0.0
  %177 = vmatprep.subr.mxu0 0.0
  %178 = vmatpush2.msra.mxu0 0.0
  %179 = vmatprep.subr.mxu0 0.0
  %180 = vmatpush2.msra.mxu0 0.0
  %181 = vmatprep.subr.mxu0 0.0
  %182 = vmatpush2.msra.mxu0 0.0
  %183 = vmatprep.subr.mxu0 0.0
  %184 = vmatpush2.msra.mxu0 0.0
  %185 = vmatprep.subr.mxu0 0.0
  %186 = vmatpush2.msra.mxu0 0.0
  %187 = vmatprep.subr.mxu0 0.0
  %188 = vmatpush2.msra.mxu0 0.0
  %189 = vmatprep.subr.mxu0 0.0
  %190 = vmatpush2.msra.mxu0 0.0
  %191 = vmatprep.subr.mxu0 0.0
  %192 = vmatpush2.msra.mxu0 0.0
  %193 = vmatprep.mubr.f32.mxu0 0.0
  %194 = vmatmul.mubr.f32.gmra.mxu0 %v43
  %v195 = vpop.f32.mrf.mxu0
  %v196 = vadd.f32 %v39, %v195
  %v197 = vpop.f32.mrf.mxu0
  %v198 = vadd.f32 %v39, %v197
  %199 = vdwg.mxu0
  %v204 = vcombine.low %v125, %v127
  %v205 = vcombine.low %v196, %v198
  %208 = vst [vmem:[%s3] sm:$0xff] %v204
  %209 = vst [vmem:[%s3 + $0x8] sm:$0xff] %v205
  // Predicated region
  $region14: #{mgrl_block_forward.12} parent=0 // pred_check
    _
  $region15: #{mgrl_block_forward.12} parent=0 // pred_check_branch
    %211 = sbr.rel (0) target = $region17
  $region16: #{mgrl_block_forward.12} parent=0 // pred_region
    _
  $region17: #{mgrl_block_forward.12} parent=0 // pred_fallthru
    _
  // Predicated region
  $region18: #{mgrl_block_forward.12} parent=0 // pred_check
    _
  $region19: #{mgrl_block_forward.12} parent=0 // pred_check_branch
    %213 = sbr.rel (0) target = $region21
  $region20: #{mgrl_block_forward.12} parent=0 // pred_region
    _
  $region21: #{mgrl_block_forward.12} parent=0 // pred_fallthru
    _

// kernel: mgrl_block_forward.13
$region0: #{mgrl_block_forward.13}
  #allocation0 [shape = 'u32[]', space=smem, size = 0x4, offset = 0x4, fixed_abs, tag = 'smem constant byte address 0x4 - core index']
  #allocation1 [shape = 'u32[144,128]{1,0:T(1,128)}', space=vmem, size = 0x12000, scoped, tag = 'internal scratch']
  %s0 = inlined_call_operand.vmem [shape: f32[4,4], index: 0, kind: input, shape index: {}]
  %s1 = inlined_call_operand.vmem [shape: f32[4,512], index: 1, kind: input, shape index: {}]
  %s2 = inlined_call_operand.vmem [shape: f32[4,1], index: 2, kind: input, shape index: {}]
  %s3 = inlined_call_operand.vmem [shape: f32[4,512], index: 3, kind: output, shape index: {}]
  %s4 = sld [smem:[#allocation0]]
  $region22: #{mgrl_block_forward.13} parent=0
    _
  %s6 = ssub.s32 1, %s4
  %s7 = scalar_select 0, %s6, %s4
  // Predicated region
  $region2: #{mgrl_block_forward.13} parent=0 // pred_check
    _
  $region3: #{mgrl_block_forward.13} parent=0 // pred_check_branch
    %9 = sbr.rel (0) target = $region5
  $region4: #{mgrl_block_forward.13} parent=0 // pred_region
    _
  $region5: #{mgrl_block_forward.13} parent=0 // pred_fallthru
    _
  // Predicated region
  $region6: #{mgrl_block_forward.13} parent=0 // pred_check
    _
  $region7: #{mgrl_block_forward.13} parent=0 // pred_check_branch
    %11 = sbr.rel (0) target = $region9
  $region8: #{mgrl_block_forward.13} parent=0 // pred_region
    _
  $region9: #{mgrl_block_forward.13} parent=0 // pred_fallthru
    _
  // Predicated region
  $region10: #{mgrl_block_forward.13} parent=0 // pred_check
    _
  $region11: #{mgrl_block_forward.13} parent=0 // pred_check_branch
    %13 = sbr.rel (0) target = $region13
  $region12: #{mgrl_block_forward.13} parent=0 // pred_region
    _
  $region13: #{mgrl_block_forward.13} parent=0 // pred_fallthru
    _
  %v14 = vld [vmem:[%s0] sm:$0xf]
  %v15 = vld [vmem:[%s1] sm:$0xff]
  %v16 = vld [vmem:[%s1 + $0x8] sm:$0xff]
  %v17 = vld [vmem:[%s2] sm:$0xf]
  %19 = vset.pattern.permute.xlu0 0
  %20 = vperm.xlu0 %19, %v17
  %v21 = vpop.permute.xlu0 %20
  %v25 = vcombine.high %v15, %v15
  %v26 = vcombine.high %v16, %v16
  %vm27 = vcmask 31744
  %v29 = vsel %vm27, %v14, 0
  %vm31 = vcmask 1043456
  %v32 = vsel %vm31, %v15, 0
  %v34 = vsel %vm31, %v25, 0
  %v36 = vsel %vm31, %v16, 0
  %v38 = vsel %vm31, %v26, 0
  %40 = vmatprep.subr.mxu0 0.0
  %41 = vmatpush1.msra.mxu0 0.0
  %42 = vmatprep.subr.mxu0 0.0
  %43 = vmatpush1.msra.mxu0 0.0
  %44 = vmatprep.subr.mxu0 0.0
  %45 = vmatpush1.msra.mxu0 0.0
  %46 = vmatprep.subr.mxu0 0.0
  %47 = vmatpush1.msra.mxu0 0.0
  %48 = vmatprep.subr.mxu0 0.0
  %49 = vmatpush1.msra.mxu0 0.0
  %50 = vmatprep.subr.mxu0 0.0
  %51 = vmatpush1.msra.mxu0 0.0
  %52 = vmatprep.subr.mxu0 0.0
  %53 = vmatpush1.msra.mxu0 0.0
  %54 = vmatprep.subr.mxu0 0.0
  %55 = vmatpush1.msra.mxu0 0.0
  %56 = vmatprep.subr.mxu0 0.0
  %57 = vmatpush1.msra.mxu0 0.0
  %58 = vmatprep.subr.mxu0 0.0
  %59 = vmatpush1.msra.mxu0 0.0
  %60 = vmatprep.subr.mxu0 0.0
  %61 = vmatpush1.msra.mxu0 0.0
  %62 = vmatprep.subr.mxu0 0.0
  %63 = vmatpush1.msra.mxu0 0.0
  %64 = vmatprep.subr.mxu0 0.0
  %65 = vmatpush1.msra.mxu0 0.0
  %66 = vmatprep.subr.mxu0 0.0
  %67 = vmatpush1.msra.mxu0 0.0
  %68 = vmatprep.subr.mxu0 0.0
  %69 = vmatpush1.msra.mxu0 0.0
  %70 = vmatprep.subr.mxu0 %v34
  %71 = vmatpush1.msra.mxu0 %v32
  %72 = vmatprep.subr.mxu0 0.0
  %73 = vmatpush2.msra.mxu0 0.0
  %74 = vmatprep.subr.mxu0 0.0
  %75 = vmatpush2.msra.mxu0 0.0
  %76 = vmatprep.subr.mxu0 0.0
  %77 = vmatpush2.msra.mxu0 0.0
  %78 = vmatprep.subr.mxu0 0.0
  %79 = vmatpush2.msra.mxu0 0.0
  %80 = vmatprep.subr.mxu0 0.0
  %81 = vmatpush2.msra.mxu0 0.0
  %82 = vmatprep.subr.mxu0 0.0
  %83 = vmatpush2.msra.mxu0 0.0
  %84 = vmatprep.subr.mxu0 0.0
  %85 = vmatpush2.msra.mxu0 0.0
  %86 = vmatprep.subr.mxu0 0.0
  %87 = vmatpush2.msra.mxu0 0.0
  %88 = vmatprep.subr.mxu0 0.0
  %89 = vmatpush2.msra.mxu0 0.0
  %90 = vmatprep.subr.mxu0 0.0
  %91 = vmatpush2.msra.mxu0 0.0
  %92 = vmatprep.subr.mxu0 0.0
  %93 = vmatpush2.msra.mxu0 0.0
  %94 = vmatprep.subr.mxu0 0.0
  %95 = vmatpush2.msra.mxu0 0.0
  %96 = vmatprep.subr.mxu0 0.0
  %97 = vmatpush2.msra.mxu0 0.0
  %98 = vmatprep.subr.mxu0 0.0
  %99 = vmatpush2.msra.mxu0 0.0
  %100 = vmatprep.subr.mxu0 0.0
  %101 = vmatpush2.msra.mxu0 0.0
  %102 = vmatprep.subr.mxu0 0.0
  %103 = vmatpush2.msra.mxu0 0.0
  %104 = vmatprep.mubr.f32.mxu0 0.0
  %105 = vmatmul.mubr.f32.gmra.mxu0 %v29
  %v106 = vpop.f32.mrf.mxu0
  %v107 = vadd.f32 %v21, %v106
  %v108 = vpop.f32.mrf.mxu0
  %v109 = vadd.f32 %v21, %v108
  %110 = vdwg.mxu0
  %111 = vmatprep.subr.mxu0 0.0
  %112 = vmatpush1.msra.mxu0 0.0
  %113 = vmatprep.subr.mxu0 0.0
  %114 = vmatpush1.msra.mxu0 0.0
  %115 = vmatprep.subr.mxu0 0.0
  %116 = vmatpush1.msra.mxu0 0.0
  %117 = vmatprep.subr.mxu0 0.0
  %118 = vmatpush1.msra.mxu0 0.0
  %119 = vmatprep.subr.mxu0 0.0
  %120 = vmatpush1.msra.mxu0 0.0
  %121 = vmatprep.subr.mxu0 0.0
  %122 = vmatpush1.msra.mxu0 0.0
  %123 = vmatprep.subr.mxu0 0.0
  %124 = vmatpush1.msra.mxu0 0.0
  %125 = vmatprep.subr.mxu0 0.0
  %126 = vmatpush1.msra.mxu0 0.0
  %127 = vmatprep.subr.mxu0 0.0
  %128 = vmatpush1.msra.mxu0 0.0
  %129 = vmatprep.subr.mxu0 0.0
  %130 = vmatpush1.msra.mxu0 0.0
  %131 = vmatprep.subr.mxu0 0.0
  %132 = vmatpush1.msra.mxu0 0.0
  %133 = vmatprep.subr.mxu0 0.0
  %134 = vmatpush1.msra.mxu0 0.0
  %135 = vmatprep.subr.mxu0 0.0
  %136 = vmatpush1.msra.mxu0 0.0
  %137 = vmatprep.subr.mxu0 0.0
  %138 = vmatpush1.msra.mxu0 0.0
  %139 = vmatprep.subr.mxu0 0.0
  %140 = vmatpush1.msra.mxu0 0.0
  %141 = vmatprep.subr.mxu0 %v38
  %142 = vmatpush1.msra.mxu0 %v36
  %143 = vmatprep.subr.mxu0 0.0
  %144 = vmatpush2.msra.mxu0 0.0
  %145 = vmatprep.subr.mxu0 0.0
  %146 = vmatpush2.msra.mxu0 0.0
  %147 = vmatprep.subr.mxu0 0.0
  %148 = vmatpush2.msra.mxu0 0.0
  %149 = vmatprep.subr.mxu0 0.0
  %150 = vmatpush2.msra.mxu0 0.0
  %151 = vmatprep.subr.mxu0 0.0
  %152 = vmatpush2.msra.mxu0 0.0
  %153 = vmatprep.subr.mxu0 0.0
  %154 = vmatpush2.msra.mxu0 0.0
  %155 = vmatprep.subr.mxu0 0.0
  %156 = vmatpush2.msra.mxu0 0.0
  %157 = vmatprep.subr.mxu0 0.0
  %158 = vmatpush2.msra.mxu0 0.0
  %159 = vmatprep.subr.mxu0 0.0
  %160 = vmatpush2.msra.mxu0 0.0
  %161 = vmatprep.subr.mxu0 0.0
  %162 = vmatpush2.msra.mxu0 0.0
  %163 = vmatprep.subr.mxu0 0.0
  %164 = vmatpush2.msra.mxu0 0.0
  %165 = vmatprep.subr.mxu0 0.0
  %166 = vmatpush2.msra.mxu0 0.0
  %167 = vmatprep.subr.mxu0 0.0
  %168 = vmatpush2.msra.mxu0 0.0
  %169 = vmatprep.subr.mxu0 0.0
  %170 = vmatpush2.msra.mxu0 0.0
  %171 = vmatprep.subr.mxu0 0.0
  %172 = vmatpush2.msra.mxu0 0.0
  %173 = vmatprep.subr.mxu0 0.0
  %174 = vmatpush2.msra.mxu0 0.0
  %175 = vmatprep.mubr.f32.mxu0 0.0
  %176 = vmatmul.mubr.f32.gmra.mxu0 %v29
  %v177 = vpop.f32.mrf.mxu0
  %v178 = vadd.f32 %v21, %v177
  %v179 = vpop.f32.mrf.mxu0
  %v180 = vadd.f32 %v21, %v179
  %181 = vdwg.mxu0
  %v186 = vcombine.low %v107, %v109
  %v187 = vcombine.low %v178, %v180
  %190 = vst [vmem:[%s3] sm:$0xff] %v186
  %191 = vst [vmem:[%s3 + $0x8] sm:$0xff] %v187
  // Predicated region
  $region14: #{mgrl_block_forward.13} parent=0 // pred_check
    _
  $region15: #{mgrl_block_forward.13} parent=0 // pred_check_branch
    %193 = sbr.rel (0) target = $region17
  $region16: #{mgrl_block_forward.13} parent=0 // pred_region
    _
  $region17: #{mgrl_block_forward.13} parent=0 // pred_fallthru
    _
  // Predicated region
  $region18: #{mgrl_block_forward.13} parent=0 // pred_check
    _
  $region19: #{mgrl_block_forward.13} parent=0 // pred_check_branch
    %195 = sbr.rel (0) target = $region21
  $region20: #{mgrl_block_forward.13} parent=0 // pred_region
    _
  $region21: #{mgrl_block_forward.13} parent=0 // pred_fallthru
    _

</llo_original>
